<compile_context>
chip_gen: v6e
topology: v6e:2x2x1
jax: 0.10.0
libtpu: 0.0.40
codegen_flags: <defaults>
</compile_context>

<pallas_src>
from functools import partial

import jax
import jax.numpy as jnp
from jax.experimental import pallas as pl
from jax.experimental.pallas import tpu as pltpu


def _round_up(v, m):
    return (v + m - 1) // m * m


def _residual_block_kernel(a_ref, xw_ref, x_ref, ws_ref, bc_ref, bs_ref,
                           o_ref, acc_ref, *, negative_slope):
    # Grid = (row tiles [parallel], K tiles over n_pad [arbitrary, last]).
    k = pl.program_id(1)

    @pl.when(k == 0)
    def _():
        acc_ref[...] = jnp.zeros_like(acc_ref)

    # Hot loop: A_hat row/col tile (bf16) @ (X @ W_conv_folded) block (bf16), f32 acc.
    acc_ref[...] += jnp.dot(a_ref[...], xw_ref[...],
                            preferred_element_type=jnp.float32)

    @pl.when(k == pl.num_programs(1) - 1)
    def _():
        # Conv branch epilogue: folded BN bias + LeakyReLU.  Dropout = identity (eval).
        h = acc_ref[...] + bc_ref[...]
        h = jnp.where(h > 0, h, negative_slope * h)
        # Shortcut Linear on this row tile, residual add, final LeakyReLU.
        res = jnp.dot(x_ref[...], ws_ref[...],
                      preferred_element_type=jnp.float32) + bs_ref[...]
        out = h + res
        o_ref[...] = jnp.where(out > 0, out, negative_slope * out).astype(o_ref.dtype)


def build_normalized_adjacency(edge_index, num_nodes, dtype=jnp.float32):
    """Mirrors the module's forward: add self loops, deg from edge_index[0],
    norm = d^-1/2[src] * d^-1/2[dst]; dense A_hat[dst, src] += norm."""
    src = edge_index[0]
    dst = edge_index[1]
    loop = jnp.arange(num_nodes, dtype=src.dtype)
    src = jnp.concatenate([src, loop])
    dst = jnp.concatenate([dst, loop])
    deg = jnp.zeros((num_nodes,), dtype).at[src].add(1.0)
    deg_inv_sqrt = jnp.where(deg > 0, jax.lax.rsqrt(deg), 0.0)
    norm = deg_inv_sqrt[src] * deg_inv_sqrt[dst]
    a = jnp.zeros((num_nodes, num_nodes), dtype).at[dst, src].add(norm)
    return a


def residual_block_forward(x, edge_index, w_conv, b_conv, w_sc, b_sc,
                           bn_gamma, bn_beta, bn_mean, bn_var,
                           *, negative_slope=0.1, eps=1e-5,
                           tile_m=256, tile_k=1024):
    """x: (N, C_in), edge_index: (2, E) int32 -> (N, C_out). Eval-mode forward."""
    n, c_in = x.shape
    c_out = w_conv.shape[1]
    dtype = x.dtype

    # Graph preprocessing (data-dependent scatter) stays in plain JAX, in f32.
    a_hat = build_normalized_adjacency(edge_index, n, jnp.float32)

    # Fold eval-mode BatchNorm1d running stats into the conv weight / bias (exact, f32).
    bn_scale = (bn_gamma / jnp.sqrt(bn_var + eps)).astype(jnp.float32)
    bn_shift = (bn_beta - bn_mean * bn_scale).astype(jnp.float32)
    w_conv_f = w_conv.astype(jnp.float32) * bn_scale[None, :]
    b_conv_f = b_conv.astype(jnp.float32) * bn_scale + bn_shift

    # Reassociate the conv branch: precompute XW = X @ W_conv_folded once (cheap),
    # so the kernel only does the bandwidth-dominant A_hat @ XW.
    xw = jnp.dot(x.astype(jnp.float32), w_conv_f, precision="highest")

    # Tiling: rows in TM=256 tiles (parallel axis), contraction over n_pad in TK tiles.
    tm = int(tile_m)
    tm = max(8, (tm // 8) * 8)
    n_pad = _round_up(max(n, tm), tm)
    tk = int(tile_k)
    while n_pad % tk != 0:          # tk halves until it divides n_pad (>= tm >= 256)
        tk //= 2
    tk = max(tk, 128)
    c_out_pad = _round_up(c_out, 128)   # lane-dense (unmasked) stores

    # Padded / cast operands.  A_hat and XW carry ~all the HBM bytes -> bf16.
    a_p = jnp.zeros((n_pad, n_pad), jnp.bfloat16).at[:n, :n].set(
        a_hat.astype(jnp.bfloat16))
    xw_p = jnp.zeros((n_pad, c_out_pad), jnp.bfloat16).at[:n, :c_out].set(
        xw.astype(jnp.bfloat16))
    x_p = jnp.zeros((n_pad, c_in), jnp.float32).at[:n, :].set(x.astype(jnp.float32))
    ws_p = jnp.zeros((c_in, c_out_pad), jnp.float32).at[:, :c_out].set(
        w_sc.astype(jnp.float32))
    bc_p = jnp.zeros((1, c_out_pad), jnp.float32).at[0, :c_out].set(b_conv_f)
    bs_p = jnp.zeros((1, c_out_pad), jnp.float32).at[0, :c_out].set(
        b_sc.astype(jnp.float32))

    grid_m = n_pad // tm
    grid_k = n_pad // tk

    flops = (2 * n_pad * n_pad * c_out_pad       # A_hat @ XW
             + 2 * n_pad * c_in * c_out_pad      # shortcut X @ W_sc
             + 6 * n_pad * c_out_pad)            # bias / leaky / residual / leaky
    bytes_accessed = (2 * a_p.size                         # bf16 A_hat
                      + 2 * xw_p.size * grid_m             # bf16 XW, re-read per row tile
                      + 4 * (x_p.size + ws_p.size + bc_p.size + bs_p.size)
                      + 4 * n_pad * c_out_pad)             # f32 output

    kernel = partial(_residual_block_kernel, negative_slope=negative_slope)

    # Per-step VMEM (double-buffered A (tm,tk) bf16 + XW (tk,c_out_pad) bf16 + small
    # residents + f32 acc) is ~2-3 MiB -> well under the 16/32/32 MiB default scoped
    # limits on v5e/v6e/v7x, so no vmem_limit_bytes override is needed.
    out = pl.pallas_call(
        kernel,
        out_shape=jax.ShapeDtypeStruct((n_pad, c_out_pad), jnp.float32),
        grid=(grid_m, grid_k),
        in_specs=[
            pl.BlockSpec((tm, tk), lambda i, k: (i, k)),          # A_hat tile (bf16)
            pl.BlockSpec((tk, c_out_pad), lambda i, k: (k, 0)),   # XW K-block (bf16)
            pl.BlockSpec((tm, c_in), lambda i, k: (i, 0)),        # X row tile (shortcut)
            pl.BlockSpec((c_in, c_out_pad), lambda i, k: (0, 0)), # W_shortcut, resident
            pl.BlockSpec((1, c_out_pad), lambda i, k: (0, 0)),    # folded conv bias
            pl.BlockSpec((1, c_out_pad), lambda i, k: (0, 0)),    # shortcut bias
        ],
        out_specs=pl.BlockSpec((tm, c_out_pad), lambda i, k: (i, 0)),
        scratch_shapes=[pltpu.VMEM((tm, c_out_pad), jnp.float32)],
        compiler_params=pltpu.CompilerParams(
            dimension_semantics=("parallel", "arbitrary")),
        cost_estimate=pl.CostEstimate(flops=flops, transcendentals=0,
                                      bytes_accessed=bytes_accessed),
    )(a_p, xw_p, x_p, ws_p, bc_p, bs_p)

    return out[:n, :c_out].astype(dtype)


def xavier_uniform(key, fan_in, fan_out, gain=1.0, dtype=jnp.float32):
    # matches torch.nn.init.xavier_uniform_ bound, stored as (in_features, out_features)
    limit = gain * (6.0 / (fan_in + fan_out)) ** 0.5
    return jax.random.uniform(key, (fan_in, fan_out), dtype=dtype,
                              minval=-limit, maxval=limit)


if __name__ == "__main__":
    num_nodes, num_edges = 300, 1200      # exercises row padding (n_pad=512, grid_m=2)
    in_channels, out_channels = 16, 32
    negative_slope = 0.1
    eps = 1e-5

    key = jax.random.PRNGKey(0)
    kx, ke, kwc, kws = jax.random.split(key, 4)

    x = jax.random.normal(kx, (num_nodes, in_channels), dtype=jnp.float32)
    edge_index = jax.random.randint(ke, (2, num_edges), 0, num_nodes, dtype=jnp.int32)

    # reset_parameters(): xavier_uniform with leaky_relu gain for conv, gain=1 for
    # shortcut, zero biases, BN weight=1 / bias=0 (+ default running stats 0/1).
    gain = (2.0 / (1.0 + negative_slope ** 2)) ** 0.5
    w_conv = xavier_uniform(kwc, in_channels, out_channels, gain=gain)
    b_conv = jnp.zeros((out_channels,), jnp.float32)
    w_sc = xavier_uniform(kws, in_channels, out_channels, gain=1.0)
    b_sc = jnp.zeros((out_channels,), jnp.float32)

    bn_gamma = jnp.ones((out_channels,), jnp.float32)
    bn_beta = jnp.zeros((out_channels,), jnp.float32)
    bn_mean = jnp.zeros((out_channels,), jnp.float32)
    bn_var = jnp.ones((out_channels,), jnp.float32)

    out = residual_block_forward(x, edge_index, w_conv, b_conv, w_sc, b_sc,
                                 bn_gamma, bn_beta, bn_mean, bn_var,
                                 negative_slope=negative_slope, eps=eps)
    jax.block_until_ready(out)

    # Plain-JAX reference (same eval-mode semantics), full f32.
    a_hat = build_normalized_adjacency(edge_index, num_nodes, jnp.float32)
    h = jnp.dot(jnp.dot(a_hat, x, precision="highest"), w_conv,
                precision="highest") + b_conv
    h = (h - bn_mean) / jnp.sqrt(bn_var + eps) * bn_gamma + bn_beta
    h = jnp.where(h > 0, h, negative_slope * h)
    res = jnp.dot(x, w_sc, precision="highest") + b_sc
    ref = h + res
    ref = jnp.where(ref > 0, ref, negative_slope * ref)

    assert out.shape == (num_nodes, out_channels)
    max_err = float(jnp.max(jnp.abs(out - ref)))
    # A_hat / XW are streamed in bf16 (f32 accumulation) -> relaxed tolerance.
    assert jnp.allclose(out, ref, atol=3e-2, rtol=3e-2), max_err

    print("KERNEL_OK")
</pallas_src>

<mosaic_0001>
module attributes {stable_mosaic.version = 11 : i64} {
  func.func @_residual_block_kernel(%arg0: i32, %arg1: i32, %arg2: memref<256x512xbf16, #tpu.memory_space<vmem>>, %arg3: memref<512x128xbf16, #tpu.memory_space<vmem>>, %arg4: memref<256x16xf32, #tpu.memory_space<vmem>>, %arg5: memref<16x128xf32, #tpu.memory_space<vmem>>, %arg6: memref<1x128xf32, #tpu.memory_space<vmem>>, %arg7: memref<1x128xf32, #tpu.memory_space<vmem>>, %arg8: memref<256x128xf32, #tpu.memory_space<vmem>>, %arg9: memref<256x128xf32, #tpu.memory_space<vmem>>) attributes {dimension_semantics = [#tpu.dimension_semantics<parallel>, #tpu.dimension_semantics<arbitrary>], iteration_bounds = array<i64: 2, 1>, scalar_prefetch = 0 : i64, scratch_operands = 1 : i64, tpu.core_type = #tpu.core_type<tc>, window_params = [{transform_indices = @transform_0, window_bounds = array<i64: 256, 512>}, {transform_indices = @transform_1, window_bounds = array<i64: 512, 128>}, {transform_indices = @transform_2, window_bounds = array<i64: 256, 16>}, {pipeline_mode = #tpu.pipeline_mode<synchronous>, transform_indices = @transform_3, window_bounds = array<i64: 16, 128>}, {pipeline_mode = #tpu.pipeline_mode<synchronous>, transform_indices = @transform_4, window_bounds = array<i64: 1, 128>}, {pipeline_mode = #tpu.pipeline_mode<synchronous>, transform_indices = @transform_5, window_bounds = array<i64: 1, 128>}, {transform_indices = @transform_6, window_bounds = array<i64: 256, 128>}]} {
    %c0_i32 = arith.constant 0 : i32
    %0 = arith.cmpi eq, %arg1, %c0_i32 : i32
    %1 = arith.extui %0 : i1 to i32
    %c0_i32_0 = arith.constant 0 : i32
    %2 = arith.cmpi ne, %1, %c0_i32_0 : i32
    scf.if %2 {
      %cst_10 = arith.constant 0.000000e+00 : f32
      %12 = vector.broadcast %cst_10 : f32 to vector<256x128xf32>
      %c0_11 = arith.constant 0 : index
      %c0_12 = arith.constant 0 : index
      %13 = vector.load %arg9[%c0_11, %c0_12] : memref<256x128xf32, #tpu.memory_space<vmem>>, vector<256x128xf32>
      tpu.vector_store %arg9[%c0_11, %c0_12], %12 {strides = array<i32>} : memref<256x128xf32, #tpu.memory_space<vmem>>, vector<256x128xf32>,
    } else {
    }
    %c0 = arith.constant 0 : index
    %c0_1 = arith.constant 0 : index
    %3 = vector.load %arg9[%c0, %c0_1] : memref<256x128xf32, #tpu.memory_space<vmem>>, vector<256x128xf32>
    %c0_2 = arith.constant 0 : index
    %c0_3 = arith.constant 0 : index
    %4 = vector.load %arg2[%c0_2, %c0_3] : memref<256x512xbf16, #tpu.memory_space<vmem>>, vector<256x512xbf16>
    %c0_4 = arith.constant 0 : index
    %c0_5 = arith.constant 0 : index
    %5 = vector.load %arg3[%c0_4, %c0_5] : memref<512x128xbf16, #tpu.memory_space<vmem>>, vector<512x128xbf16>
    %cst = arith.constant dense<0.000000e+00> : vector<256x128xf32>
    %6 = tpu.matmul %4, %5, %cst {dimension_numbers = #tpu.dot_dimension_numbers<[1], [0], [0], [1], [0, 0, 1, 1], [], []>} : vector<256x512xbf16>, vector<512x128xbf16>, vector<256x128xf32> -> vector<256x128xf32>
    %7 = arith.addf %3, %6 : vector<256x128xf32>
    %c0_6 = arith.constant 0 : index
    %c0_7 = arith.constant 0 : index
    %8 = vector.load %arg9[%c0_6, %c0_7] : memref<256x128xf32, #tpu.memory_space<vmem>>, vector<256x128xf32>
    tpu.vector_store %arg9[%c0_6, %c0_7], %7 {strides = array<i32>} : memref<256x128xf32, #tpu.memory_space<vmem>>, vector<256x128xf32>,
    %c0_i32_8 = arith.constant 0 : i32
    %9 = arith.cmpi eq, %arg1, %c0_i32_8 : i32
    %10 = arith.extui %9 : i1 to i32
    %c0_i32_9 = arith.constant 0 : i32
    %11 = arith.cmpi ne, %10, %c0_i32_9 : i32
    scf.if %11 {
      %c0_10 = arith.constant 0 : index
      %c0_11 = arith.constant 0 : index
      %12 = vector.load %arg9[%c0_10, %c0_11] : memref<256x128xf32, #tpu.memory_space<vmem>>, vector<256x128xf32>
      %c0_12 = arith.constant 0 : index
      %c0_13 = arith.constant 0 : index
      %13 = vector.load %arg6[%c0_12, %c0_13] : memref<1x128xf32, #tpu.memory_space<vmem>>, vector<1x128xf32>
      %14 = vector.broadcast %13 : vector<1x128xf32> to vector<256x128xf32>
      %15 = arith.addf %12, %14 : vector<256x128xf32>
      %cst_14 = arith.constant 0.000000e+00 : f32
      %16 = vector.broadcast %cst_14 : f32 to vector<256x128xf32>
      %17 = arith.cmpf ogt, %15, %16 : vector<256x128xf32>
      %cst_15 = arith.constant 1.000000e-01 : f32
      %18 = vector.broadcast %cst_15 : f32 to vector<256x128xf32>
      %19 = arith.mulf %18, %15 : vector<256x128xf32>
      %20 = arith.select %17, %15, %19 : vector<256x128xi1>, vector<256x128xf32>
      %c0_16 = arith.constant 0 : index
      %c0_17 = arith.constant 0 : index
      %21 = vector.load %arg4[%c0_16, %c0_17] : memref<256x16xf32, #tpu.memory_space<vmem>>, vector<256x16xf32>
      %c0_18 = arith.constant 0 : index
      %c0_19 = arith.constant 0 : index
      %22 = vector.load %arg5[%c0_18, %c0_19] : memref<16x128xf32, #tpu.memory_space<vmem>>, vector<16x128xf32>
      %cst_20 = arith.constant dense<0.000000e+00> : vector<256x128xf32>
      %23 = tpu.matmul %21, %22, %cst_20 {dimension_numbers = #tpu.dot_dimension_numbers<[1], [0], [0], [1], [0, 0, 1, 1], [], []>} : vector<256x16xf32>, vector<16x128xf32>, vector<256x128xf32> -> vector<256x128xf32>
      %c0_21 = arith.constant 0 : index
      %c0_22 = arith.constant 0 : index
      %24 = vector.load %arg7[%c0_21, %c0_22] : memref<1x128xf32, #tpu.memory_space<vmem>>, vector<1x128xf32>
      %25 = vector.broadcast %24 : vector<1x128xf32> to vector<256x128xf32>
      %26 = arith.addf %23, %25 : vector<256x128xf32>
      %27 = arith.addf %20, %26 : vector<256x128xf32>
      %cst_23 = arith.constant 0.000000e+00 : f32
      %28 = vector.broadcast %cst_23 : f32 to vector<256x128xf32>
      %29 = arith.cmpf ogt, %27, %28 : vector<256x128xf32>
      %cst_24 = arith.constant 1.000000e-01 : f32
      %30 = vector.broadcast %cst_24 : f32 to vector<256x128xf32>
      %31 = arith.mulf %30, %27 : vector<256x128xf32>
      %32 = arith.select %29, %27, %31 : vector<256x128xi1>, vector<256x128xf32>
      %c0_25 = arith.constant 0 : index
      %c0_26 = arith.constant 0 : index
      %33 = vector.load %arg8[%c0_25, %c0_26] : memref<256x128xf32, #tpu.memory_space<vmem>>, vector<256x128xf32>
      tpu.vector_store %arg8[%c0_25, %c0_26], %32 {strides = array<i32>} : memref<256x128xf32, #tpu.memory_space<vmem>>, vector<256x128xf32>,
    } else {
    }
    return
  }
  func.func @transform_0(%arg0: i32, %arg1: i32) -> (i32, i32) {
    %c0_i32 = arith.constant 0 : i32
    return %arg0, %arg1 : i32, i32
  }
  func.func @transform_1(%arg0: i32, %arg1: i32) -> (i32, i32) {
    %c0_i32 = arith.constant 0 : i32
    %c0_i32_0 = arith.constant 0 : i32
    return %arg1, %c0_i32 : i32, i32
  }
  func.func @transform_2(%arg0: i32, %arg1: i32) -> (i32, i32) {
    %c0_i32 = arith.constant 0 : i32
    %c0_i32_0 = arith.constant 0 : i32
    return %arg0, %c0_i32 : i32, i32
  }
  func.func @transform_3(%arg0: i32, %arg1: i32) -> (i32, i32) {
    %c0_i32 = arith.constant 0 : i32
    %c0_i32_0 = arith.constant 0 : i32
    %c0_i32_1 = arith.constant 0 : i32
    return %c0_i32, %c0_i32_0 : i32, i32
  }
  func.func @transform_4(%arg0: i32, %arg1: i32) -> (i32, i32) {
    %c0_i32 = arith.constant 0 : i32
    %c0_i32_0 = arith.constant 0 : i32
    %c0_i32_1 = arith.constant 0 : i32
    return %c0_i32, %c0_i32_0 : i32, i32
  }
  func.func @transform_5(%arg0: i32, %arg1: i32) -> (i32, i32) {
    %c0_i32 = arith.constant 0 : i32
    %c0_i32_0 = arith.constant 0 : i32
    %c0_i32_1 = arith.constant 0 : i32
    return %c0_i32, %c0_i32_0 : i32, i32
  }
  func.func @transform_6(%arg0: i32, %arg1: i32) -> (i32, i32) {
    %c0_i32 = arith.constant 0 : i32
    %c0_i32_0 = arith.constant 0 : i32
    return %arg0, %c0_i32 : i32, i32
  }
}

</mosaic_0001>

<llo_original>
// kernel: tpu_custom_call.1
$region0: #{tpu_custom_call.1}
  #allocation0 [shape = 'u32[]', space=smem, size = 0x4, offset = 0x4, fixed_abs, tag = 'smem constant byte address 0x4 - core index']
  #allocation1 [shape = 'u32[144,128]{1,0:T(1,128)}', space=vmem, size = 0x12000, scoped, tag = 'internal scratch']
  #allocation2 [shape = 'f32[256,128]{1,0:T(8,128)}', space=vmem, size = 0x20000, scoped, tag = 'scratch operand']
  %s0 = inlined_call_operand.hbm [shape: bf16[512,512], index: 0, kind: input, shape index: {}]
  %s1 = inlined_call_operand.vmem [shape: bf16[512,128], index: 1, kind: input, shape index: {}]
  %s2 = inlined_call_operand.vmem [shape: f32[512,16], index: 2, kind: input, shape index: {}]
  %s3 = inlined_call_operand.vmem [shape: f32[16,128], index: 3, kind: input, shape index: {}]
  %s4 = inlined_call_operand.vmem [shape: f32[1,128], index: 4, kind: input, shape index: {}]
  %s5 = inlined_call_operand.vmem [shape: f32[1,128], index: 5, kind: input, shape index: {}]
  %s6 = inlined_call_operand.hbm [shape: f32[512,128], index: 6, kind: output, shape index: {}]
  %s7 = sld [smem:[#allocation0]]
  $region69: #{tpu_custom_call.1} parent=0
    _
  %s9 = ssub.s32 1, %s7
  %s10 = scalar_select 0, %s9, %s7
  $region1: #{tpu_custom_call.1} parent=0
    #allocation3 [shape = 'u8[524288]{0}', space=vmem, size = 0x80000, scoped, tag = 'input window, operand 0']
    #allocation4 [shape = 's32[2]{0}', space=sflag, size = 0x8, scoped, tag = 'scoped memory for tpu_custom_call.1']
    #allocation5 [shape = 's32[2]{0}', space=sflag, size = 0x8, scoped, tag = 'scoped memory for tpu_custom_call.1']
    #allocation6 [shape = 'u8[262144]{0}', space=vmem, size = 0x40000, scoped, tag = 'output window, operand 0']
    %11 = vsyncpa [#allocation4], 0
    %s12 = scalar_lea.sflag [#allocation4], 1
    %13 = vsyncpa %s12, 0
    %14 = vsyncpa [#allocation5], 0
    %s15 = scalar_lea.sflag [#allocation5], 1
    %16 = vsyncpa %s15, 0
    loop: start=0, step=1, limit=4
    $region2: #{tpu_custom_call.1} parent=1 // loop_pre_header
      _
    $region3: #{tpu_custom_call.1} parent=1 // loop_header
      %s18 = sphi 0, %s22
      %p19 = scmp.ge.s32.totalorder %s18, 4
      %s25 = sphi 0, %s37
      %s26 = sphi 0, %s33
      %s27 = sphi 0, %s25
      %s28 = sphi 0, %s26
      %s29 = sphi 0, %s27
      %s30 = sphi 0, %s28
      %s42 = sphi 0, %s44
      %s45 = sphi 0, %s42
      %s46 = sphi 0, %s45
      %s62 = sphi 0, %s46
      %s68 = sphi 0, %s70
      %s71 = sphi 0, %s68
      %s72 = sphi 0, %s71
      %s88 = sphi 0, %s72
      %s94 = sphi 0, %s96
      %s97 = sphi 0, %s94
      %s98 = sphi 0, %s97
      %s114 = sphi 0, %s98
      %s118 = sphi 0, %s118
      %s120 = sphi 0, %s118
      %s121 = sphi 0, %s120
      %s135 = sphi 0, %s121
      %s139 = sphi 0, %s139
      %s141 = sphi 0, %s139
      %s142 = sphi 0, %s141
      %s156 = sphi 0, %s142
      %s160 = sphi 0, %s160
      %s162 = sphi 0, %s160
      %s163 = sphi 0, %s162
      %s177 = sphi 0, %s163
      %s183 = sphi 0, %s185
      %s186 = sphi 0, %s183
      %s187 = sphi 0, %s186
      %s203 = sphi 0, %s187
    $region4: #{tpu_custom_call.1} parent=1 // loop_header_branch
      %21 = sbr.rel (%p19) target = $region8
    $region5: #{tpu_custom_call.1} parent=1 // loop_body
      %s23 = ssub.s32 %s18, 1
      %s24 = ssub.s32 %s18, 2
      %s31 = sadd.s32 1, %s26
      %p32 = scmp.ge.s32.totalorder %s31, 1
      %s33 = scalar_select %p32, 0, %s31
      %s34 = sadd.s32 1, %s25
      %s35 = scalar_select %p32, %s34, %s25
      %p36 = scmp.ge.s32.totalorder %s35, 2
      %s37 = scalar_select %p36, 0, %s35
      %s38 = ssub.s32 %s25, %s37
      %s39 = ssub.s32 %s26, %s33
      %s40 = sor.u32 %s38, %s39
      %p41 = scmp.eq.s32.totalorder %s40, 0
      %s43 = sadd.s32 %s42, 1
      %s44 = scalar_select %p41, %s42, %s43
      %p47 = pneg %p41
      %p48 = scmp.eq.s32.totalorder %s18, 1
      %p49 = por %p47, %p48
      %p50 = scmp.ne.s32.totalorder %s42, %s45
      %p51 = scmp.eq.s32.totalorder %s18, 0
      %p52 = por %p50, %p51
      %p53 = scmp.ne.s32.totalorder %s42, %s45
      %p54 = scmp.eq.s32.totalorder %s23, 1
      %p55 = por %p53, %p54
      %p56 = scmp.ne.s32.totalorder %s45, %s46
      %p57 = scmp.eq.s32.totalorder %s23, 0
      %p58 = por %p56, %p57
      %p59 = scmp.ne.s32.totalorder %s45, %s46
      %p60 = scmp.eq.s32.totalorder %s24, 1
      %p61 = por %p59, %p60
      %p63 = scmp.ne.s32.totalorder %s46, %s62
      %p64 = scmp.eq.s32.totalorder %s24, 0
      %p65 = por %p63, %p64
      %s66 = ssub.s32 %s26, %s33
      %p67 = scmp.eq.s32.totalorder %s66, 0
      %s69 = sadd.s32 %s68, 1
      %s70 = scalar_select %p67, %s68, %s69
      %p73 = pneg %p67
      %p74 = scmp.eq.s32.totalorder %s18, 1
      %p75 = por %p73, %p74
      %p76 = scmp.ne.s32.totalorder %s68, %s71
      %p77 = scmp.eq.s32.totalorder %s18, 0
      %p78 = por %p76, %p77
      %p79 = scmp.ne.s32.totalorder %s68, %s71
      %p80 = scmp.eq.s32.totalorder %s23, 1
      %p81 = por %p79, %p80
      %p82 = scmp.ne.s32.totalorder %s71, %s72
      %p83 = scmp.eq.s32.totalorder %s23, 0
      %p84 = por %p82, %p83
      %p85 = scmp.ne.s32.totalorder %s71, %s72
      %p86 = scmp.eq.s32.totalorder %s24, 1
      %p87 = por %p85, %p86
      %p89 = scmp.ne.s32.totalorder %s72, %s88
      %p90 = scmp.eq.s32.totalorder %s24, 0
      %p91 = por %p89, %p90
      %s92 = ssub.s32 %s25, %s37
      %p93 = scmp.eq.s32.totalorder %s92, 0
      %s95 = sadd.s32 %s94, 1
      %s96 = scalar_select %p93, %s94, %s95
      %p99 = pneg %p93
      %p100 = scmp.eq.s32.totalorder %s18, 1
      %p101 = por %p99, %p100
      %p102 = scmp.ne.s32.totalorder %s94, %s97
      %p103 = scmp.eq.s32.totalorder %s18, 0
      %p104 = por %p102, %p103
      %p105 = scmp.ne.s32.totalorder %s94, %s97
      %p106 = scmp.eq.s32.totalorder %s23, 1
      %p107 = por %p105, %p106
      %p108 = scmp.ne.s32.totalorder %s97, %s98
      %p109 = scmp.eq.s32.totalorder %s23, 0
      %p110 = por %p108, %p109
      %p111 = scmp.ne.s32.totalorder %s97, %s98
      %p112 = scmp.eq.s32.totalorder %s24, 1
      %p113 = por %p111, %p112
      %p115 = scmp.ne.s32.totalorder %s98, %s114
      %p116 = scmp.eq.s32.totalorder %s24, 0
      %p117 = por %p115, %p116
      %s119 = sadd.s32 %s118, 1
      %p122 = scmp.eq.s32.totalorder %s18, 1
      %p123 = scmp.ne.s32.totalorder %s118, %s120
      %p124 = scmp.eq.s32.totalorder %s18, 0
      %p125 = por %p123, %p124
      %p126 = scmp.ne.s32.totalorder %s118, %s120
      %p127 = scmp.eq.s32.totalorder %s23, 1
      %p128 = por %p126, %p127
      %p129 = scmp.ne.s32.totalorder %s120, %s121
      %p130 = scmp.eq.s32.totalorder %s23, 0
      %p131 = por %p129, %p130
      %p132 = scmp.ne.s32.totalorder %s120, %s121
      %p133 = scmp.eq.s32.totalorder %s24, 1
      %p134 = por %p132, %p133
      %p136 = scmp.ne.s32.totalorder %s121, %s135
      %p137 = scmp.eq.s32.totalorder %s24, 0
      %p138 = por %p136, %p137
      %s140 = sadd.s32 %s139, 1
      %p143 = scmp.eq.s32.totalorder %s18, 1
      %p144 = scmp.ne.s32.totalorder %s139, %s141
      %p145 = scmp.eq.s32.totalorder %s18, 0
      %p146 = por %p144, %p145
      %p147 = scmp.ne.s32.totalorder %s139, %s141
      %p148 = scmp.eq.s32.totalorder %s23, 1
      %p149 = por %p147, %p148
      %p150 = scmp.ne.s32.totalorder %s141, %s142
      %p151 = scmp.eq.s32.totalorder %s23, 0
      %p152 = por %p150, %p151
      %p153 = scmp.ne.s32.totalorder %s141, %s142
      %p154 = scmp.eq.s32.totalorder %s24, 1
      %p155 = por %p153, %p154
      %p157 = scmp.ne.s32.totalorder %s142, %s156
      %p158 = scmp.eq.s32.totalorder %s24, 0
      %p159 = por %p157, %p158
      %s161 = sadd.s32 %s160, 1
      %p164 = scmp.eq.s32.totalorder %s18, 1
      %p165 = scmp.ne.s32.totalorder %s160, %s162
      %p166 = scmp.eq.s32.totalorder %s18, 0
      %p167 = por %p165, %p166
      %p168 = scmp.ne.s32.totalorder %s160, %s162
      %p169 = scmp.eq.s32.totalorder %s23, 1
      %p170 = por %p168, %p169
      %p171 = scmp.ne.s32.totalorder %s162, %s163
      %p172 = scmp.eq.s32.totalorder %s23, 0
      %p173 = por %p171, %p172
      %p174 = scmp.ne.s32.totalorder %s162, %s163
      %p175 = scmp.eq.s32.totalorder %s24, 1
      %p176 = por %p174, %p175
      %p178 = scmp.ne.s32.totalorder %s163, %s177
      %p179 = scmp.eq.s32.totalorder %s24, 0
      %p180 = por %p178, %p179
      %s181 = ssub.s32 %s25, %s37
      %p182 = scmp.eq.s32.totalorder %s181, 0
      %s184 = sadd.s32 %s183, 1
      %s185 = scalar_select %p182, %s183, %s184
      %p188 = pneg %p182
      %p189 = scmp.eq.s32.totalorder %s18, 1
      %p190 = por %p188, %p189
      %p191 = scmp.ne.s32.totalorder %s183, %s186
      %p192 = scmp.eq.s32.totalorder %s18, 0
      %p193 = por %p191, %p192
      %p194 = scmp.ne.s32.totalorder %s183, %s186
      %p195 = scmp.eq.s32.totalorder %s23, 1
      %p196 = por %p194, %p195
      %p197 = scmp.ne.s32.totalorder %s186, %s187
      %p198 = scmp.eq.s32.totalorder %s23, 0
      %p199 = por %p197, %p198
      %p200 = scmp.ne.s32.totalorder %s186, %s187
      %p201 = scmp.eq.s32.totalorder %s24, 1
      %p202 = por %p200, %p201
      %p204 = scmp.ne.s32.totalorder %s187, %s203
      %p205 = scmp.eq.s32.totalorder %s24, 0
      %p206 = por %p204, %p205
      %p207 = scmp.le.s32.totalorder 1, %s18
      %p208 = scmp.lt.s32.totalorder %s18, 3
      %p209 = pnand %p207, %p208
      %p210 = pneg %p209
      // Predicated region
      $region9: #{tpu_custom_call.1} parent=5 // pred_check
        _
      $region10: #{tpu_custom_call.1} parent=5 // pred_check_branch
        %212 = sbr.rel (%p209) target = $region12
      $region11: #{tpu_custom_call.1} parent=5 // pred_region
        %s213 = ssub.s32 %s18, 1
        // Predicated region
        $region13: #{tpu_custom_call.1} parent=11 // pred_check
          %p214 = pneg %p84
        $region14: #{tpu_custom_call.1} parent=11 // pred_check_branch
          %216 = sbr.rel (%p214) target = $region16
        $region15: #{tpu_custom_call.1} parent=11 // pred_region
          %s217 = smul.u32 64, %s28
          %p218 = scmp.lt.s32.totalorder %s217, 63
          %s219 = scalar_select %p218, %s217, 63
          %s220 = smul.addr %s219, 4
          %s221 = scalar_lea.vmem %s1, %s220
          %s222 = smul.u32 64, %s28
        $region16: #{tpu_custom_call.1} parent=11 // pred_fallthru
          _
        // Predicated region
        $region17: #{tpu_custom_call.1} parent=11 // pred_check
          %p223 = pneg %p131
        $region18: #{tpu_custom_call.1} parent=11 // pred_check_branch
          %225 = sbr.rel (%p223) target = $region20
        $region19: #{tpu_custom_call.1} parent=11 // pred_region
          _
        $region20: #{tpu_custom_call.1} parent=11 // pred_fallthru
          _
        // Predicated region
        $region21: #{tpu_custom_call.1} parent=11 // pred_check
          %p226 = pneg %p152
        $region22: #{tpu_custom_call.1} parent=11 // pred_check_branch
          %228 = sbr.rel (%p226) target = $region24
        $region23: #{tpu_custom_call.1} parent=11 // pred_region
          _
        $region24: #{tpu_custom_call.1} parent=11 // pred_fallthru
          _
        // Predicated region
        $region25: #{tpu_custom_call.1} parent=11 // pred_check
          %p229 = pneg %p173
        $region26: #{tpu_custom_call.1} parent=11 // pred_check_branch
          %231 = sbr.rel (%p229) target = $region28
        $region27: #{tpu_custom_call.1} parent=11 // pred_region
          _
        $region28: #{tpu_custom_call.1} parent=11 // pred_fallthru
          _
      $region12: #{tpu_custom_call.1} parent=5 // pred_fallthru
        _
      %p232 = scmp.lt.s32.totalorder %s18, 2
      // Predicated region
      $region29: #{tpu_custom_call.1} parent=5 // pred_check
        %p233 = pneg %p232
      $region30: #{tpu_custom_call.1} parent=5 // pred_check_branch
        %235 = sbr.rel (%p233) target = $region32
      $region31: #{tpu_custom_call.1} parent=5 // pred_region
        // Predicated region
        $region33: #{tpu_custom_call.1} parent=31 // pred_check
          %p236 = pneg %p52
        $region34: #{tpu_custom_call.1} parent=31 // pred_check_branch
          %238 = sbr.rel (%p236) target = $region36
        $region35: #{tpu_custom_call.1} parent=31 // pred_region
          %s239 = sand.u32 %s42, 1
          %s240 = scalar_lea.sflag [#allocation4], %s239
          %s241 = sand.u32 %s42, 1
          %s242 = smul.addr %s241, 512
          %s243 = scalar_lea.vmem [#allocation3], %s242
          %s244 = smul.u32 32, %s25
          %s245 = smul.u32 4, %s26
          %s247 = ssub.s32 8192, 8192
          %248 = vsyncadd %s240, %s247
          %s249 = smul.addr %s244, 4
          %s250 = sadd.s32 %s245, %s249
          %s251 = smul.addr %s250, 64
          %s252 = scalar_lea.hbm %s0, %s251
          %s253 = sshll.u32 %s243, 4
          %s254 = int_to_ptr.vmem [resolvable:$true] %s253
          %259 = dma.hbm_to_vmem [thread:$0]  %s252, 8192, %s254, %s240, 256, 256, 16
        $region36: #{tpu_custom_call.1} parent=31 // pred_fallthru
          _
        // Predicated region
        $region37: #{tpu_custom_call.1} parent=31 // pred_check
          %p260 = pneg %p104
        $region38: #{tpu_custom_call.1} parent=31 // pred_check_branch
          %262 = sbr.rel (%p260) target = $region40
        $region39: #{tpu_custom_call.1} parent=31 // pred_region
          %s263 = smul.u32 32, %s25
          %p264 = scmp.lt.s32.totalorder %s263, 63
          %s265 = scalar_select %p264, %s263, 63
          %s266 = smul.addr %s265, 8
          %s267 = scalar_lea.vmem %s2, %s266
          %s268 = smul.u32 32, %s25
        $region40: #{tpu_custom_call.1} parent=31 // pred_fallthru
          _
      $region32: #{tpu_custom_call.1} parent=5 // pred_fallthru
        _
      %p269 = scmp.le.s32.totalorder 1, %s18
      %p270 = scmp.lt.s32.totalorder %s18, 3
      %p271 = pnand %p269, %p270
      %p272 = pneg %p271
      // Predicated region
      $region41: #{tpu_custom_call.1} parent=5 // pred_check
        _
      $region42: #{tpu_custom_call.1} parent=5 // pred_check_branch
        %274 = sbr.rel (%p271) target = $region44
      $region43: #{tpu_custom_call.1} parent=5 // pred_region
        %s275 = ssub.s32 %s18, 1
        %s276 = sand.u32 %s45, 1
        %s277 = scalar_lea.sflag [#allocation4], %s276
        %s278 = sand.u32 %s45, 1
        %s279 = smul.addr %s278, 512
        %s280 = scalar_lea.vmem [#allocation3], %s279
        // Predicated region
        $region45: #{tpu_custom_call.1} parent=43 // pred_check
          %p281 = pneg %p58
        $region46: #{tpu_custom_call.1} parent=43 // pred_check_branch
          %283 = sbr.rel (%p281) target = $region48
        $region47: #{tpu_custom_call.1} parent=43 // pred_region
          %284 = dma.done %s277, 8192
        $region48: #{tpu_custom_call.1} parent=43 // pred_fallthru
          _
        %s285 = sand.u32 %s45, 1
        %s286 = scalar_lea.sflag [#allocation4], %s285
        %s287 = sand.u32 %s45, 1
        %s288 = smul.addr %s287, 512
        %s289 = scalar_lea.vmem [#allocation3], %s288
        %p290 = pneg %p58
        %p291 = pneg %p55
        %s292 = smul.u32 64, %s28
        %p293 = scmp.lt.s32.totalorder %s292, 63
        %s294 = scalar_select %p293, %s292, 63
        %s295 = smul.addr %s294, 4
        %s296 = scalar_lea.vmem %s1, %s295
        %p297 = pneg %p84
        %p298 = pneg %p81
        %s299 = smul.u32 32, %s27
        %p300 = scmp.lt.s32.totalorder %s299, 63
        %s301 = scalar_select %p300, %s299, 63
        %s302 = smul.addr %s301, 8
        %s303 = scalar_lea.vmem %s2, %s302
        %p304 = pneg %p110
        %p305 = pneg %p107
        %p306 = pneg %p131
        %p307 = pneg %p128
        %p308 = pneg %p152
        %p309 = pneg %p149
        %p310 = pneg %p173
        %p311 = pneg %p170
        %p312 = pneg %p199
        %p313 = pneg %p196
        %s314 = sand.u32 %s186, 1
        %s315 = scalar_lea.sflag [#allocation5], %s314
        %s316 = sand.u32 %s186, 1
        %s317 = smul.addr %s316, 256
        %s318 = scalar_lea.vmem [#allocation6], %s317
        %s319 = smul.u32 32, %s27
        %s320 = smul.u32 4, %s28
        %s321 = smul.u32 64, %s28
        %p322 = scmp.lt.s32.totalorder %s321, 63
        %s323 = scalar_select %p322, %s321, 63
        %s324 = smul.addr %s323, 4
        %s325 = scalar_lea.vmem %s1, %s324
        %s326 = smul.u32 64, %s28
        %s327 = smul.u32 32, %s27
        %p328 = scmp.lt.s32.totalorder %s327, 63
        %s329 = scalar_select %p328, %s327, 63
        %s330 = smul.addr %s329, 8
        %s331 = scalar_lea.vmem %s2, %s330
        %s332 = smul.u32 32, %s27
        %s333 = smul.u32 32, %s27
        %p335 = scmp.eq.s32.totalorder %s28, 0
        // Predicated region
        $region49: #{tpu_custom_call.1} parent=43 // pred_check
          %p336 = pneg %p335
        $region50: #{tpu_custom_call.1} parent=43 // pred_check_branch
          %338 = sbr.rel (%p336) target = $region52
        $region51: #{tpu_custom_call.1} parent=43 // pred_region
          %339 = vst [vmem:[#allocation2] sm:$0xff] 0.0
          %340 = vst [vmem:[#allocation2 + $0x8] sm:$0xff] 0.0
          %341 = vst [vmem:[#allocation2 + $0x10] sm:$0xff] 0.0
          %342 = vst [vmem:[#allocation2 + $0x18] sm:$0xff] 0.0
          %343 = vst [vmem:[#allocation2 + $0x20] sm:$0xff] 0.0
          %344 = vst [vmem:[#allocation2 + $0x28] sm:$0xff] 0.0
          %345 = vst [vmem:[#allocation2 + $0x30] sm:$0xff] 0.0
          %346 = vst [vmem:[#allocation2 + $0x38] sm:$0xff] 0.0
          %347 = vst [vmem:[#allocation2 + $0x40] sm:$0xff] 0.0
          %348 = vst [vmem:[#allocation2 + $0x48] sm:$0xff] 0.0
          %349 = vst [vmem:[#allocation2 + $0x50] sm:$0xff] 0.0
          %350 = vst [vmem:[#allocation2 + $0x58] sm:$0xff] 0.0
          %351 = vst [vmem:[#allocation2 + $0x60] sm:$0xff] 0.0
          %352 = vst [vmem:[#allocation2 + $0x68] sm:$0xff] 0.0
          %353 = vst [vmem:[#allocation2 + $0x70] sm:$0xff] 0.0
          %354 = vst [vmem:[#allocation2 + $0x78] sm:$0xff] 0.0
          %355 = vst [vmem:[#allocation2 + $0x80] sm:$0xff] 0.0
          %356 = vst [vmem:[#allocation2 + $0x88] sm:$0xff] 0.0
          %357 = vst [vmem:[#allocation2 + $0x90] sm:$0xff] 0.0
          %358 = vst [vmem:[#allocation2 + $0x98] sm:$0xff] 0.0
          %359 = vst [vmem:[#allocation2 + $0xa0] sm:$0xff] 0.0
          %360 = vst [vmem:[#allocation2 + $0xa8] sm:$0xff] 0.0
          %361 = vst [vmem:[#allocation2 + $0xb0] sm:$0xff] 0.0
          %362 = vst [vmem:[#allocation2 + $0xb8] sm:$0xff] 0.0
          %363 = vst [vmem:[#allocation2 + $0xc0] sm:$0xff] 0.0
          %364 = vst [vmem:[#allocation2 + $0xc8] sm:$0xff] 0.0
          %365 = vst [vmem:[#allocation2 + $0xd0] sm:$0xff] 0.0
          %366 = vst [vmem:[#allocation2 + $0xd8] sm:$0xff] 0.0
          %367 = vst [vmem:[#allocation2 + $0xe0] sm:$0xff] 0.0
          %368 = vst [vmem:[#allocation2 + $0xe8] sm:$0xff] 0.0
          %369 = vst [vmem:[#allocation2 + $0xf0] sm:$0xff] 0.0
          %370 = vst [vmem:[#allocation2 + $0xf8] sm:$0xff] 0.0
        $region52: #{tpu_custom_call.1} parent=43 // pred_fallthru
          _
        %v371 = vld [vmem:[#allocation2] sm:$0xff]
        %v372 = vld [vmem:[#allocation2 + $0x8] sm:$0xff]
        %v373 = vld [vmem:[#allocation2 + $0x10] sm:$0xff]
        %v374 = vld [vmem:[#allocation2 + $0x18] sm:$0xff]
        %v375 = vld [vmem:[#allocation2 + $0x20] sm:$0xff]
        %v376 = vld [vmem:[#allocation2 + $0x28] sm:$0xff]
        %v377 = vld [vmem:[#allocation2 + $0x30] sm:$0xff]
        %v378 = vld [vmem:[#allocation2 + $0x38] sm:$0xff]
        %v379 = vld [vmem:[#allocation2 + $0x40] sm:$0xff]
        %v380 = vld [vmem:[#allocation2 + $0x48] sm:$0xff]
        %v381 = vld [vmem:[#allocation2 + $0x50] sm:$0xff]
        %v382 = vld [vmem:[#allocation2 + $0x58] sm:$0xff]
        %v383 = vld [vmem:[#allocation2 + $0x60] sm:$0xff]
        %v384 = vld [vmem:[#allocation2 + $0x68] sm:$0xff]
        %v385 = vld [vmem:[#allocation2 + $0x70] sm:$0xff]
        %v386 = vld [vmem:[#allocation2 + $0x78] sm:$0xff]
        %v387 = vld [vmem:[#allocation2 + $0x80] sm:$0xff]
        %v388 = vld [vmem:[#allocation2 + $0x88] sm:$0xff]
        %v389 = vld [vmem:[#allocation2 + $0x90] sm:$0xff]
        %v390 = vld [vmem:[#allocation2 + $0x98] sm:$0xff]
        %v391 = vld [vmem:[#allocation2 + $0xa0] sm:$0xff]
        %v392 = vld [vmem:[#allocation2 + $0xa8] sm:$0xff]
        %v393 = vld [vmem:[#allocation2 + $0xb0] sm:$0xff]
        %v394 = vld [vmem:[#allocation2 + $0xb8] sm:$0xff]
        %v395 = vld [vmem:[#allocation2 + $0xc0] sm:$0xff]
        %v396 = vld [vmem:[#allocation2 + $0xc8] sm:$0xff]
        %v397 = vld [vmem:[#allocation2 + $0xd0] sm:$0xff]
        %v398 = vld [vmem:[#allocation2 + $0xd8] sm:$0xff]
        %v399 = vld [vmem:[#allocation2 + $0xe0] sm:$0xff]
        %v400 = vld [vmem:[#allocation2 + $0xe8] sm:$0xff]
        %v401 = vld [vmem:[#allocation2 + $0xf0] sm:$0xff]
        %v402 = vld [vmem:[#allocation2 + $0xf8] sm:$0xff]
        %v403 = vld [vmem:[%s280] sm:$0xff]
        %v404 = vld [vmem:[%s280 + $0x8] sm:$0xff]
        %v405 = vld [vmem:[%s280 + $0x10] sm:$0xff]
        %v406 = vld [vmem:[%s280 + $0x18] sm:$0xff]
        %v407 = vld [vmem:[%s280 + $0x20] sm:$0xff]
        %v408 = vld [vmem:[%s280 + $0x28] sm:$0xff]
        %v409 = vld [vmem:[%s280 + $0x30] sm:$0xff]
        %v410 = vld [vmem:[%s280 + $0x38] sm:$0xff]
        %v411 = vld [vmem:[%s280 + $0x40] sm:$0xff]
        %v412 = vld [vmem:[%s280 + $0x48] sm:$0xff]
        %v413 = vld [vmem:[%s280 + $0x50] sm:$0xff]
        %v414 = vld [vmem:[%s280 + $0x58] sm:$0xff]
        %v415 = vld [vmem:[%s280 + $0x60] sm:$0xff]
        %v416 = vld [vmem:[%s280 + $0x68] sm:$0xff]
        %v417 = vld [vmem:[%s280 + $0x70] sm:$0xff]
        %v418 = vld [vmem:[%s280 + $0x78] sm:$0xff]
        %v419 = vld [vmem:[%s280 + $0x80] sm:$0xff]
        %v420 = vld [vmem:[%s280 + $0x88] sm:$0xff]
        %v421 = vld [vmem:[%s280 + $0x90] sm:$0xff]
        %v422 = vld [vmem:[%s280 + $0x98] sm:$0xff]
        %v423 = vld [vmem:[%s280 + $0xa0] sm:$0xff]
        %v424 = vld [vmem:[%s280 + $0xa8] sm:$0xff]
        %v425 = vld [vmem:[%s280 + $0xb0] sm:$0xff]
        %v426 = vld [vmem:[%s280 + $0xb8] sm:$0xff]
        %v427 = vld [vmem:[%s280 + $0xc0] sm:$0xff]
        %v428 = vld [vmem:[%s280 + $0xc8] sm:$0xff]
        %v429 = vld [vmem:[%s280 + $0xd0] sm:$0xff]
        %v430 = vld [vmem:[%s280 + $0xd8] sm:$0xff]
        %v431 = vld [vmem:[%s280 + $0xe0] sm:$0xff]
        %v432 = vld [vmem:[%s280 + $0xe8] sm:$0xff]
        %v433 = vld [vmem:[%s280 + $0xf0] sm:$0xff]
        %v434 = vld [vmem:[%s280 + $0xf8] sm:$0xff]
        %v435 = vld [vmem:[%s280 + $0x100] sm:$0xff]
        %v436 = vld [vmem:[%s280 + $0x108] sm:$0xff]
        %v437 = vld [vmem:[%s280 + $0x110] sm:$0xff]
        %v438 = vld [vmem:[%s280 + $0x118] sm:$0xff]
        %v439 = vld [vmem:[%s280 + $0x120] sm:$0xff]
        %v440 = vld [vmem:[%s280 + $0x128] sm:$0xff]
        %v441 = vld [vmem:[%s280 + $0x130] sm:$0xff]
        %v442 = vld [vmem:[%s280 + $0x138] sm:$0xff]
        %v443 = vld [vmem:[%s280 + $0x140] sm:$0xff]
        %v444 = vld [vmem:[%s280 + $0x148] sm:$0xff]
        %v445 = vld [vmem:[%s280 + $0x150] sm:$0xff]
        %v446 = vld [vmem:[%s280 + $0x158] sm:$0xff]
        %v447 = vld [vmem:[%s280 + $0x160] sm:$0xff]
        %v448 = vld [vmem:[%s280 + $0x168] sm:$0xff]
        %v449 = vld [vmem:[%s280 + $0x170] sm:$0xff]
        %v450 = vld [vmem:[%s280 + $0x178] sm:$0xff]
        %v451 = vld [vmem:[%s280 + $0x180] sm:$0xff]
        %v452 = vld [vmem:[%s280 + $0x188] sm:$0xff]
        %v453 = vld [vmem:[%s280 + $0x190] sm:$0xff]
        %v454 = vld [vmem:[%s280 + $0x198] sm:$0xff]
        %v455 = vld [vmem:[%s280 + $0x1a0] sm:$0xff]
        %v456 = vld [vmem:[%s280 + $0x1a8] sm:$0xff]
        %v457 = vld [vmem:[%s280 + $0x1b0] sm:$0xff]
        %v458 = vld [vmem:[%s280 + $0x1b8] sm:$0xff]
        %v459 = vld [vmem:[%s280 + $0x1c0] sm:$0xff]
        %v460 = vld [vmem:[%s280 + $0x1c8] sm:$0xff]
        %v461 = vld [vmem:[%s280 + $0x1d0] sm:$0xff]
        %v462 = vld [vmem:[%s280 + $0x1d8] sm:$0xff]
        %v463 = vld [vmem:[%s280 + $0x1e0] sm:$0xff]
        %v464 = vld [vmem:[%s280 + $0x1e8] sm:$0xff]
        %v465 = vld [vmem:[%s280 + $0x1f0] sm:$0xff]
        %v466 = vld [vmem:[%s280 + $0x1f8] sm:$0xff]
        %v467 = vld [vmem:[%s325] sm:$0xf]
        %v468 = vld [vmem:[%s325 + $0x4] sm:$0xf]
        %v469 = vld [vmem:[%s325 + $0x8] sm:$0xf]
        %v470 = vld [vmem:[%s325 + $0xc] sm:$0xf]
        %v471 = vld [vmem:[%s325 + $0x10] sm:$0xf]
        %v472 = vld [vmem:[%s325 + $0x14] sm:$0xf]
        %v473 = vld [vmem:[%s325 + $0x18] sm:$0xf]
        %v474 = vld [vmem:[%s325 + $0x1c] sm:$0xf]
        %v475 = vld [vmem:[%s325 + $0x20] sm:$0xf]
        %v476 = vld [vmem:[%s325 + $0x24] sm:$0xf]
        %v477 = vld [vmem:[%s325 + $0x28] sm:$0xf]
        %v478 = vld [vmem:[%s325 + $0x2c] sm:$0xf]
        %v479 = vld [vmem:[%s325 + $0x30] sm:$0xf]
        %v480 = vld [vmem:[%s325 + $0x34] sm:$0xf]
        %v481 = vld [vmem:[%s325 + $0x38] sm:$0xf]
        %v482 = vld [vmem:[%s325 + $0x3c] sm:$0xf]
        %v483 = vld [vmem:[%s325 + $0x40] sm:$0xf]
        %v484 = vld [vmem:[%s325 + $0x44] sm:$0xf]
        %v485 = vld [vmem:[%s325 + $0x48] sm:$0xf]
        %v486 = vld [vmem:[%s325 + $0x4c] sm:$0xf]
        %v487 = vld [vmem:[%s325 + $0x50] sm:$0xf]
        %v488 = vld [vmem:[%s325 + $0x54] sm:$0xf]
        %v489 = vld [vmem:[%s325 + $0x58] sm:$0xf]
        %v490 = vld [vmem:[%s325 + $0x5c] sm:$0xf]
        %v491 = vld [vmem:[%s325 + $0x60] sm:$0xf]
        %v492 = vld [vmem:[%s325 + $0x64] sm:$0xf]
        %v493 = vld [vmem:[%s325 + $0x68] sm:$0xf]
        %v494 = vld [vmem:[%s325 + $0x6c] sm:$0xf]
        %v495 = vld [vmem:[%s325 + $0x70] sm:$0xf]
        %v496 = vld [vmem:[%s325 + $0x74] sm:$0xf]
        %v497 = vld [vmem:[%s325 + $0x78] sm:$0xf]
        %v498 = vld [vmem:[%s325 + $0x7c] sm:$0xf]
        %v499 = vld [vmem:[%s325 + $0x80] sm:$0xf]
        %v500 = vld [vmem:[%s325 + $0x84] sm:$0xf]
        %v501 = vld [vmem:[%s325 + $0x88] sm:$0xf]
        %v502 = vld [vmem:[%s325 + $0x8c] sm:$0xf]
        %v503 = vld [vmem:[%s325 + $0x90] sm:$0xf]
        %v504 = vld [vmem:[%s325 + $0x94] sm:$0xf]
        %v505 = vld [vmem:[%s325 + $0x98] sm:$0xf]
        %v506 = vld [vmem:[%s325 + $0x9c] sm:$0xf]
        %v507 = vld [vmem:[%s325 + $0xa0] sm:$0xf]
        %v508 = vld [vmem:[%s325 + $0xa4] sm:$0xf]
        %v509 = vld [vmem:[%s325 + $0xa8] sm:$0xf]
        %v510 = vld [vmem:[%s325 + $0xac] sm:$0xf]
        %v511 = vld [vmem:[%s325 + $0xb0] sm:$0xf]
        %v512 = vld [vmem:[%s325 + $0xb4] sm:$0xf]
        %v513 = vld [vmem:[%s325 + $0xb8] sm:$0xf]
        %v514 = vld [vmem:[%s325 + $0xbc] sm:$0xf]
        %v515 = vld [vmem:[%s325 + $0xc0] sm:$0xf]
        %v516 = vld [vmem:[%s325 + $0xc4] sm:$0xf]
        %v517 = vld [vmem:[%s325 + $0xc8] sm:$0xf]
        %v518 = vld [vmem:[%s325 + $0xcc] sm:$0xf]
        %v519 = vld [vmem:[%s325 + $0xd0] sm:$0xf]
        %v520 = vld [vmem:[%s325 + $0xd4] sm:$0xf]
        %v521 = vld [vmem:[%s325 + $0xd8] sm:$0xf]
        %v522 = vld [vmem:[%s325 + $0xdc] sm:$0xf]
        %v523 = vld [vmem:[%s325 + $0xe0] sm:$0xf]
        %v524 = vld [vmem:[%s325 + $0xe4] sm:$0xf]
        %v525 = vld [vmem:[%s325 + $0xe8] sm:$0xf]
        %v526 = vld [vmem:[%s325 + $0xec] sm:$0xf]
        %v527 = vld [vmem:[%s325 + $0xf0] sm:$0xf]
        %v528 = vld [vmem:[%s325 + $0xf4] sm:$0xf]
        %v529 = vld [vmem:[%s325 + $0xf8] sm:$0xf]
        %v530 = vld [vmem:[%s325 + $0xfc] sm:$0xf]
        %v595 = vunpack.c.l.b16 %v403
        %v596 = vunpack.c.h.b16 %v403
        %v597 = vunpack.c.l.b16 %v404
        %v598 = vunpack.c.h.b16 %v404
        %v599 = vunpack.c.l.b16 %v405
        %v600 = vunpack.c.h.b16 %v405
        %v601 = vunpack.c.l.b16 %v406
        %v602 = vunpack.c.h.b16 %v406
        %v603 = vunpack.c.l.b16 %v407
        %v604 = vunpack.c.h.b16 %v407
        %v605 = vunpack.c.l.b16 %v408
        %v606 = vunpack.c.h.b16 %v408
        %v607 = vunpack.c.l.b16 %v409
        %v608 = vunpack.c.h.b16 %v409
        %v609 = vunpack.c.l.b16 %v410
        %v610 = vunpack.c.h.b16 %v410
        %v611 = vunpack.c.l.b16 %v411
        %v612 = vunpack.c.h.b16 %v411
        %v613 = vunpack.c.l.b16 %v412
        %v614 = vunpack.c.h.b16 %v412
        %v615 = vunpack.c.l.b16 %v413
        %v616 = vunpack.c.h.b16 %v413
        %v617 = vunpack.c.l.b16 %v414
        %v618 = vunpack.c.h.b16 %v414
        %v619 = vunpack.c.l.b16 %v415
        %v620 = vunpack.c.h.b16 %v415
        %v621 = vunpack.c.l.b16 %v416
        %v622 = vunpack.c.h.b16 %v416
        %v623 = vunpack.c.l.b16 %v417
        %v624 = vunpack.c.h.b16 %v417
        %v625 = vunpack.c.l.b16 %v418
        %v626 = vunpack.c.h.b16 %v418
        %v627 = vunpack.c.l.b16 %v419
        %v628 = vunpack.c.h.b16 %v419
        %v629 = vunpack.c.l.b16 %v420
        %v630 = vunpack.c.h.b16 %v420
        %v631 = vunpack.c.l.b16 %v421
        %v632 = vunpack.c.h.b16 %v421
        %v633 = vunpack.c.l.b16 %v422
        %v634 = vunpack.c.h.b16 %v422
        %v635 = vunpack.c.l.b16 %v423
        %v636 = vunpack.c.h.b16 %v423
        %v637 = vunpack.c.l.b16 %v424
        %v638 = vunpack.c.h.b16 %v424
        %v639 = vunpack.c.l.b16 %v425
        %v640 = vunpack.c.h.b16 %v425
        %v641 = vunpack.c.l.b16 %v426
        %v642 = vunpack.c.h.b16 %v426
        %v643 = vunpack.c.l.b16 %v427
        %v644 = vunpack.c.h.b16 %v427
        %v645 = vunpack.c.l.b16 %v428
        %v646 = vunpack.c.h.b16 %v428
        %v647 = vunpack.c.l.b16 %v429
        %v648 = vunpack.c.h.b16 %v429
        %v649 = vunpack.c.l.b16 %v430
        %v650 = vunpack.c.h.b16 %v430
        %v651 = vunpack.c.l.b16 %v431
        %v652 = vunpack.c.h.b16 %v431
        %v653 = vunpack.c.l.b16 %v432
        %v654 = vunpack.c.h.b16 %v432
        %v655 = vunpack.c.l.b16 %v433
        %v656 = vunpack.c.h.b16 %v433
        %v657 = vunpack.c.l.b16 %v434
        %v658 = vunpack.c.h.b16 %v434
        %v659 = vunpack.c.l.b16 %v435
        %v660 = vunpack.c.h.b16 %v435
        %v661 = vunpack.c.l.b16 %v436
        %v662 = vunpack.c.h.b16 %v436
        %v663 = vunpack.c.l.b16 %v437
        %v664 = vunpack.c.h.b16 %v437
        %v665 = vunpack.c.l.b16 %v438
        %v666 = vunpack.c.h.b16 %v438
        %v667 = vunpack.c.l.b16 %v439
        %v668 = vunpack.c.h.b16 %v439
        %v669 = vunpack.c.l.b16 %v440
        %v670 = vunpack.c.h.b16 %v440
        %v671 = vunpack.c.l.b16 %v441
        %v672 = vunpack.c.h.b16 %v441
        %v673 = vunpack.c.l.b16 %v442
        %v674 = vunpack.c.h.b16 %v442
        %v675 = vunpack.c.l.b16 %v443
        %v676 = vunpack.c.h.b16 %v443
        %v677 = vunpack.c.l.b16 %v444
        %v678 = vunpack.c.h.b16 %v444
        %v679 = vunpack.c.l.b16 %v445
        %v680 = vunpack.c.h.b16 %v445
        %v681 = vunpack.c.l.b16 %v446
        %v682 = vunpack.c.h.b16 %v446
        %v683 = vunpack.c.l.b16 %v447
        %v684 = vunpack.c.h.b16 %v447
        %v685 = vunpack.c.l.b16 %v448
        %v686 = vunpack.c.h.b16 %v448
        %v687 = vunpack.c.l.b16 %v449
        %v688 = vunpack.c.h.b16 %v449
        %v689 = vunpack.c.l.b16 %v450
        %v690 = vunpack.c.h.b16 %v450
        %v691 = vunpack.c.l.b16 %v451
        %v692 = vunpack.c.h.b16 %v451
        %v693 = vunpack.c.l.b16 %v452
        %v694 = vunpack.c.h.b16 %v452
        %v695 = vunpack.c.l.b16 %v453
        %v696 = vunpack.c.h.b16 %v453
        %v697 = vunpack.c.l.b16 %v454
        %v698 = vunpack.c.h.b16 %v454
        %v699 = vunpack.c.l.b16 %v455
        %v700 = vunpack.c.h.b16 %v455
        %v701 = vunpack.c.l.b16 %v456
        %v702 = vunpack.c.h.b16 %v456
        %v703 = vunpack.c.l.b16 %v457
        %v704 = vunpack.c.h.b16 %v457
        %v705 = vunpack.c.l.b16 %v458
        %v706 = vunpack.c.h.b16 %v458
        %v707 = vunpack.c.l.b16 %v459
        %v708 = vunpack.c.h.b16 %v459
        %v709 = vunpack.c.l.b16 %v460
        %v710 = vunpack.c.h.b16 %v460
        %v711 = vunpack.c.l.b16 %v461
        %v712 = vunpack.c.h.b16 %v461
        %v713 = vunpack.c.l.b16 %v462
        %v714 = vunpack.c.h.b16 %v462
        %v715 = vunpack.c.l.b16 %v463
        %v716 = vunpack.c.h.b16 %v463
        %v717 = vunpack.c.l.b16 %v464
        %v718 = vunpack.c.h.b16 %v464
        %v719 = vunpack.c.l.b16 %v465
        %v720 = vunpack.c.h.b16 %v465
        %v721 = vunpack.c.l.b16 %v466
        %v722 = vunpack.c.h.b16 %v466
        %v723 = vpack.c.b16 %v599, %v595
        %v724 = vpack.c.b16 %v600, %v596
        %v725 = vpack.c.b16 %v601, %v597
        %v726 = vpack.c.b16 %v602, %v598
        %v727 = vpack.c.b16 %v607, %v603
        %v728 = vpack.c.b16 %v608, %v604
        %v729 = vpack.c.b16 %v609, %v605
        %v730 = vpack.c.b16 %v610, %v606
        %v731 = vpack.c.b16 %v615, %v611
        %v732 = vpack.c.b16 %v616, %v612
        %v733 = vpack.c.b16 %v617, %v613
        %v734 = vpack.c.b16 %v618, %v614
        %v735 = vpack.c.b16 %v623, %v619
        %v736 = vpack.c.b16 %v624, %v620
        %v737 = vpack.c.b16 %v625, %v621
        %v738 = vpack.c.b16 %v626, %v622
        %v739 = vpack.c.b16 %v631, %v627
        %v740 = vpack.c.b16 %v632, %v628
        %v741 = vpack.c.b16 %v633, %v629
        %v742 = vpack.c.b16 %v634, %v630
        %v743 = vpack.c.b16 %v639, %v635
        %v744 = vpack.c.b16 %v640, %v636
        %v745 = vpack.c.b16 %v641, %v637
        %v746 = vpack.c.b16 %v642, %v638
        %v747 = vpack.c.b16 %v647, %v643
        %v748 = vpack.c.b16 %v648, %v644
        %v749 = vpack.c.b16 %v649, %v645
        %v750 = vpack.c.b16 %v650, %v646
        %v751 = vpack.c.b16 %v655, %v651
        %v752 = vpack.c.b16 %v656, %v652
        %v753 = vpack.c.b16 %v657, %v653
        %v754 = vpack.c.b16 %v658, %v654
        %v755 = vpack.c.b16 %v663, %v659
        %v756 = vpack.c.b16 %v664, %v660
        %v757 = vpack.c.b16 %v665, %v661
        %v758 = vpack.c.b16 %v666, %v662
        %v759 = vpack.c.b16 %v671, %v667
        %v760 = vpack.c.b16 %v672, %v668
        %v761 = vpack.c.b16 %v673, %v669
        %v762 = vpack.c.b16 %v674, %v670
        %v763 = vpack.c.b16 %v679, %v675
        %v764 = vpack.c.b16 %v680, %v676
        %v765 = vpack.c.b16 %v681, %v677
        %v766 = vpack.c.b16 %v682, %v678
        %v767 = vpack.c.b16 %v687, %v683
        %v768 = vpack.c.b16 %v688, %v684
        %v769 = vpack.c.b16 %v689, %v685
        %v770 = vpack.c.b16 %v690, %v686
        %v771 = vpack.c.b16 %v695, %v691
        %v772 = vpack.c.b16 %v696, %v692
        %v773 = vpack.c.b16 %v697, %v693
        %v774 = vpack.c.b16 %v698, %v694
        %v775 = vpack.c.b16 %v703, %v699
        %v776 = vpack.c.b16 %v704, %v700
        %v777 = vpack.c.b16 %v705, %v701
        %v778 = vpack.c.b16 %v706, %v702
        %v779 = vpack.c.b16 %v711, %v707
        %v780 = vpack.c.b16 %v712, %v708
        %v781 = vpack.c.b16 %v713, %v709
        %v782 = vpack.c.b16 %v714, %v710
        %v783 = vpack.c.b16 %v719, %v715
        %v784 = vpack.c.b16 %v720, %v716
        %v785 = vpack.c.b16 %v721, %v717
        %v786 = vpack.c.b16 %v722, %v718
        %v915 = vunpack.c.l.b16 %v467
        %v916 = vunpack.c.l.b16 %v468
        %v917 = vunpack.c.l.b16 %v469
        %v918 = vunpack.c.l.b16 %v470
        %v919 = vunpack.c.l.b16 %v471
        %v920 = vunpack.c.l.b16 %v472
        %v921 = vunpack.c.l.b16 %v473
        %v922 = vunpack.c.l.b16 %v474
        %v923 = vunpack.c.l.b16 %v475
        %v924 = vunpack.c.l.b16 %v476
        %v925 = vunpack.c.l.b16 %v477
        %v926 = vunpack.c.l.b16 %v478
        %v927 = vunpack.c.l.b16 %v479
        %v928 = vunpack.c.l.b16 %v480
        %v929 = vunpack.c.l.b16 %v481
        %v930 = vunpack.c.l.b16 %v482
        %v931 = vunpack.c.l.b16 %v483
        %v932 = vunpack.c.l.b16 %v484
        %v933 = vunpack.c.l.b16 %v485
        %v934 = vunpack.c.l.b16 %v486
        %v935 = vunpack.c.l.b16 %v487
        %v936 = vunpack.c.l.b16 %v488
        %v937 = vunpack.c.l.b16 %v489
        %v938 = vunpack.c.l.b16 %v490
        %v939 = vunpack.c.l.b16 %v491
        %v940 = vunpack.c.l.b16 %v492
        %v941 = vunpack.c.l.b16 %v493
        %v942 = vunpack.c.l.b16 %v494
        %v943 = vunpack.c.l.b16 %v495
        %v944 = vunpack.c.l.b16 %v496
        %v945 = vunpack.c.l.b16 %v497
        %v946 = vunpack.c.l.b16 %v498
        %v947 = vunpack.c.l.b16 %v499
        %v948 = vunpack.c.l.b16 %v500
        %v949 = vunpack.c.l.b16 %v501
        %v950 = vunpack.c.l.b16 %v502
        %v951 = vunpack.c.l.b16 %v503
        %v952 = vunpack.c.l.b16 %v504
        %v953 = vunpack.c.l.b16 %v505
        %v954 = vunpack.c.l.b16 %v506
        %v955 = vunpack.c.l.b16 %v507
        %v956 = vunpack.c.l.b16 %v508
        %v957 = vunpack.c.l.b16 %v509
        %v958 = vunpack.c.l.b16 %v510
        %v959 = vunpack.c.l.b16 %v511
        %v960 = vunpack.c.l.b16 %v512
        %v961 = vunpack.c.l.b16 %v513
        %v962 = vunpack.c.l.b16 %v514
        %v963 = vunpack.c.l.b16 %v515
        %v964 = vunpack.c.l.b16 %v516
        %v965 = vunpack.c.l.b16 %v517
        %v966 = vunpack.c.l.b16 %v518
        %v967 = vunpack.c.l.b16 %v519
        %v968 = vunpack.c.l.b16 %v520
        %v969 = vunpack.c.l.b16 %v521
        %v970 = vunpack.c.l.b16 %v522
        %v971 = vunpack.c.l.b16 %v523
        %v972 = vunpack.c.l.b16 %v524
        %v973 = vunpack.c.l.b16 %v525
        %v974 = vunpack.c.l.b16 %v526
        %v975 = vunpack.c.l.b16 %v527
        %v976 = vunpack.c.l.b16 %v528
        %v977 = vunpack.c.l.b16 %v529
        %v978 = vunpack.c.l.b16 %v530
        %v979 = vpack.c.b16 %v916, %v915
        %v980 = vpack.c.b16 %v918, %v917
        %v981 = vpack.c.b16 %v920, %v919
        %v982 = vpack.c.b16 %v922, %v921
        %v983 = vpack.c.b16 %v924, %v923
        %v984 = vpack.c.b16 %v926, %v925
        %v985 = vpack.c.b16 %v928, %v927
        %v986 = vpack.c.b16 %v930, %v929
        %v987 = vpack.c.b16 %v932, %v931
        %v988 = vpack.c.b16 %v934, %v933
        %v989 = vpack.c.b16 %v936, %v935
        %v990 = vpack.c.b16 %v938, %v937
        %v991 = vpack.c.b16 %v940, %v939
        %v992 = vpack.c.b16 %v942, %v941
        %v993 = vpack.c.b16 %v944, %v943
        %v994 = vpack.c.b16 %v946, %v945
        %v995 = vpack.c.b16 %v948, %v947
        %v996 = vpack.c.b16 %v950, %v949
        %v997 = vpack.c.b16 %v952, %v951
        %v998 = vpack.c.b16 %v954, %v953
        %v999 = vpack.c.b16 %v956, %v955
        %v1000 = vpack.c.b16 %v958, %v957
        %v1001 = vpack.c.b16 %v960, %v959
        %v1002 = vpack.c.b16 %v962, %v961
        %v1003 = vpack.c.b16 %v964, %v963
        %v1004 = vpack.c.b16 %v966, %v965
        %v1005 = vpack.c.b16 %v968, %v967
        %v1006 = vpack.c.b16 %v970, %v969
        %v1007 = vpack.c.b16 %v972, %v971
        %v1008 = vpack.c.b16 %v974, %v973
        %v1009 = vpack.c.b16 %v976, %v975
        %v1010 = vpack.c.b16 %v978, %v977
        %1043 = vmatprep.subr.bf16.mxu0 0
        %1044 = vmatpush1.bf16.msra.mxu0 %v986
        %1045 = vmatprep.subr.bf16.mxu0 0
        %1046 = vmatpush1.bf16.msra.mxu0 %v985
        %1047 = vmatprep.subr.bf16.mxu0 0
        %1048 = vmatpush1.bf16.msra.mxu0 %v984
        %1049 = vmatprep.subr.bf16.mxu0 0
        %1050 = vmatpush1.bf16.msra.mxu0 %v983
        %1051 = vmatprep.subr.bf16.mxu0 0
        %1052 = vmatpush1.bf16.msra.mxu0 %v982
        %1053 = vmatprep.subr.bf16.mxu0 0
        %1054 = vmatpush1.bf16.msra.mxu0 %v981
        %1055 = vmatprep.subr.bf16.mxu0 0
        %1056 = vmatpush1.bf16.msra.mxu0 %v980
        %1057 = vmatprep.subr.bf16.mxu0 0
        %1058 = vmatpush1.bf16.msra.mxu0 %v979
        %1059 = vmatprep.subr.bf16.mxu0 0
        %1060 = vmatpush2.bf16.msra.mxu0 %v994
        %1061 = vmatprep.subr.bf16.mxu0 0
        %1062 = vmatpush2.bf16.msra.mxu0 %v993
        %1063 = vmatprep.subr.bf16.mxu0 0
        %1064 = vmatpush2.bf16.msra.mxu0 %v992
        %1065 = vmatprep.subr.bf16.mxu0 0
        %1066 = vmatpush2.bf16.msra.mxu0 %v991
        %1067 = vmatprep.subr.bf16.mxu0 0
        %1068 = vmatpush2.bf16.msra.mxu0 %v990
        %1069 = vmatprep.subr.bf16.mxu0 0
        %1070 = vmatpush2.bf16.msra.mxu0 %v989
        %1071 = vmatprep.subr.bf16.mxu0 0
        %1072 = vmatpush2.bf16.msra.mxu0 %v988
        %1073 = vmatprep.subr.bf16.mxu0 0
        %1074 = vmatpush2.bf16.msra.mxu0 %v987
        %1075 = vmatprep.mubr.bf16.mxu0 %v724
        %1076 = vmatmul.mubr.bf16.gmra.mxu0 %v723
        %v1077 = vpop.f32.mrf.mxu0
        %v1078 = vadd.f32 0.0, %v1077
        %v1079 = vpop.f32.mrf.mxu0
        %v1080 = vpop.f32.mrf.mxu0
        %v1081 = vadd.f32 0.0, %v1080
        %v1082 = vpop.f32.mrf.mxu0
        %1083 = vmatprep.mubr.bf16.mxu0 %v728
        %1084 = vmatmul.mubr.bf16.gmra.mxu0 %v727
        %v1085 = vpop.f32.mrf.mxu0
        %v1086 = vadd.f32 0.0, %v1085
        %v1087 = vpop.f32.mrf.mxu0
        %v1088 = vpop.f32.mrf.mxu0
        %v1089 = vadd.f32 0.0, %v1088
        %v1090 = vpop.f32.mrf.mxu0
        %1091 = vmatprep.mubr.bf16.mxu0 %v732
        %1092 = vmatmul.mubr.bf16.gmra.mxu0 %v731
        %v1093 = vpop.f32.mrf.mxu0
        %v1094 = vadd.f32 0.0, %v1093
        %v1095 = vpop.f32.mrf.mxu0
        %v1096 = vpop.f32.mrf.mxu0
        %v1097 = vadd.f32 0.0, %v1096
        %v1098 = vpop.f32.mrf.mxu0
        %1099 = vmatprep.mubr.bf16.mxu0 %v736
        %1100 = vmatmul.mubr.bf16.gmra.mxu0 %v735
        %v1101 = vpop.f32.mrf.mxu0
        %v1102 = vadd.f32 0.0, %v1101
        %v1103 = vpop.f32.mrf.mxu0
        %v1104 = vpop.f32.mrf.mxu0
        %v1105 = vadd.f32 0.0, %v1104
        %v1106 = vpop.f32.mrf.mxu0
        %1107 = vmatprep.mubr.bf16.mxu0 %v740
        %1108 = vmatmul.mubr.bf16.gmra.mxu0 %v739
        %v1109 = vpop.f32.mrf.mxu0
        %v1110 = vadd.f32 0.0, %v1109
        %v1111 = vpop.f32.mrf.mxu0
        %v1112 = vpop.f32.mrf.mxu0
        %v1113 = vadd.f32 0.0, %v1112
        %v1114 = vpop.f32.mrf.mxu0
        %1115 = vmatprep.mubr.bf16.mxu0 %v744
        %1116 = vmatmul.mubr.bf16.gmra.mxu0 %v743
        %v1117 = vpop.f32.mrf.mxu0
        %v1118 = vadd.f32 0.0, %v1117
        %v1119 = vpop.f32.mrf.mxu0
        %v1120 = vpop.f32.mrf.mxu0
        %v1121 = vadd.f32 0.0, %v1120
        %v1122 = vpop.f32.mrf.mxu0
        %1123 = vmatprep.mubr.bf16.mxu0 %v748
        %1124 = vmatmul.mubr.bf16.gmra.mxu0 %v747
        %v1125 = vpop.f32.mrf.mxu0
        %v1126 = vadd.f32 0.0, %v1125
        %v1127 = vpop.f32.mrf.mxu0
        %v1128 = vpop.f32.mrf.mxu0
        %v1129 = vadd.f32 0.0, %v1128
        %v1130 = vpop.f32.mrf.mxu0
        %1131 = vmatprep.mubr.bf16.mxu0 %v752
        %1132 = vmatmul.mubr.bf16.gmra.mxu0 %v751
        %v1133 = vpop.f32.mrf.mxu0
        %v1134 = vadd.f32 0.0, %v1133
        %v1135 = vpop.f32.mrf.mxu0
        %v1136 = vpop.f32.mrf.mxu0
        %v1137 = vadd.f32 0.0, %v1136
        %v1138 = vpop.f32.mrf.mxu0
        %1139 = vmatprep.mubr.bf16.mxu0 %v756
        %1140 = vmatmul.mubr.bf16.gmra.mxu0 %v755
        %v1141 = vpop.f32.mrf.mxu0
        %v1142 = vadd.f32 0.0, %v1141
        %v1143 = vpop.f32.mrf.mxu0
        %v1144 = vpop.f32.mrf.mxu0
        %v1145 = vadd.f32 0.0, %v1144
        %v1146 = vpop.f32.mrf.mxu0
        %1147 = vmatprep.mubr.bf16.mxu0 %v760
        %1148 = vmatmul.mubr.bf16.gmra.mxu0 %v759
        %v1149 = vpop.f32.mrf.mxu0
        %v1150 = vadd.f32 0.0, %v1149
        %v1151 = vpop.f32.mrf.mxu0
        %v1152 = vpop.f32.mrf.mxu0
        %v1153 = vadd.f32 0.0, %v1152
        %v1154 = vpop.f32.mrf.mxu0
        %1155 = vmatprep.mubr.bf16.mxu0 %v764
        %1156 = vmatmul.mubr.bf16.gmra.mxu0 %v763
        %v1157 = vpop.f32.mrf.mxu0
        %v1158 = vadd.f32 0.0, %v1157
        %v1159 = vpop.f32.mrf.mxu0
        %v1160 = vpop.f32.mrf.mxu0
        %v1161 = vadd.f32 0.0, %v1160
        %v1162 = vpop.f32.mrf.mxu0
        %1163 = vmatprep.mubr.bf16.mxu0 %v768
        %1164 = vmatmul.mubr.bf16.gmra.mxu0 %v767
        %v1165 = vpop.f32.mrf.mxu0
        %v1166 = vadd.f32 0.0, %v1165
        %v1167 = vpop.f32.mrf.mxu0
        %v1168 = vpop.f32.mrf.mxu0
        %v1169 = vadd.f32 0.0, %v1168
        %v1170 = vpop.f32.mrf.mxu0
        %1171 = vmatprep.mubr.bf16.mxu0 %v772
        %1172 = vmatmul.mubr.bf16.gmra.mxu0 %v771
        %v1173 = vpop.f32.mrf.mxu0
        %v1174 = vadd.f32 0.0, %v1173
        %v1175 = vpop.f32.mrf.mxu0
        %v1176 = vpop.f32.mrf.mxu0
        %v1177 = vadd.f32 0.0, %v1176
        %v1178 = vpop.f32.mrf.mxu0
        %1179 = vmatprep.mubr.bf16.mxu0 %v776
        %1180 = vmatmul.mubr.bf16.gmra.mxu0 %v775
        %v1181 = vpop.f32.mrf.mxu0
        %v1182 = vadd.f32 0.0, %v1181
        %v1183 = vpop.f32.mrf.mxu0
        %v1184 = vpop.f32.mrf.mxu0
        %v1185 = vadd.f32 0.0, %v1184
        %v1186 = vpop.f32.mrf.mxu0
        %1187 = vmatprep.mubr.bf16.mxu0 %v780
        %1188 = vmatmul.mubr.bf16.gmra.mxu0 %v779
        %v1189 = vpop.f32.mrf.mxu0
        %v1190 = vadd.f32 0.0, %v1189
        %v1191 = vpop.f32.mrf.mxu0
        %v1192 = vpop.f32.mrf.mxu0
        %v1193 = vadd.f32 0.0, %v1192
        %v1194 = vpop.f32.mrf.mxu0
        %1195 = vmatprep.mubr.bf16.mxu0 %v784
        %1196 = vmatmul.mubr.bf16.gmra.mxu0 %v783
        %v1197 = vpop.f32.mrf.mxu0
        %v1198 = vadd.f32 0.0, %v1197
        %v1199 = vpop.f32.mrf.mxu0
        %v1200 = vpop.f32.mrf.mxu0
        %v1201 = vadd.f32 0.0, %v1200
        %v1202 = vpop.f32.mrf.mxu0
        %1203 = vdwg.mxu0
        %1204 = vmatprep.subr.bf16.mxu0 0
        %1205 = vmatpush1.bf16.msra.mxu0 %v1002
        %1206 = vmatprep.subr.bf16.mxu0 0
        %1207 = vmatpush1.bf16.msra.mxu0 %v1001
        %1208 = vmatprep.subr.bf16.mxu0 0
        %1209 = vmatpush1.bf16.msra.mxu0 %v1000
        %1210 = vmatprep.subr.bf16.mxu0 0
        %1211 = vmatpush1.bf16.msra.mxu0 %v999
        %1212 = vmatprep.subr.bf16.mxu0 0
        %1213 = vmatpush1.bf16.msra.mxu0 %v998
        %1214 = vmatprep.subr.bf16.mxu0 0
        %1215 = vmatpush1.bf16.msra.mxu0 %v997
        %1216 = vmatprep.subr.bf16.mxu0 0
        %1217 = vmatpush1.bf16.msra.mxu0 %v996
        %1218 = vmatprep.subr.bf16.mxu0 0
        %1219 = vmatpush1.bf16.msra.mxu0 %v995
        %1220 = vmatprep.subr.bf16.mxu0 0
        %1221 = vmatpush2.bf16.msra.mxu0 %v1010
        %1222 = vmatprep.subr.bf16.mxu0 0
        %1223 = vmatpush2.bf16.msra.mxu0 %v1009
        %1224 = vmatprep.subr.bf16.mxu0 0
        %1225 = vmatpush2.bf16.msra.mxu0 %v1008
        %1226 = vmatprep.subr.bf16.mxu0 0
        %1227 = vmatpush2.bf16.msra.mxu0 %v1007
        %1228 = vmatprep.subr.bf16.mxu0 0
        %1229 = vmatpush2.bf16.msra.mxu0 %v1006
        %1230 = vmatprep.subr.bf16.mxu0 0
        %1231 = vmatpush2.bf16.msra.mxu0 %v1005
        %1232 = vmatprep.subr.bf16.mxu0 0
        %1233 = vmatpush2.bf16.msra.mxu0 %v1004
        %1234 = vmatprep.subr.bf16.mxu0 0
        %1235 = vmatpush2.bf16.msra.mxu0 %v1003
        %1236 = vmatprep.mubr.bf16.mxu0 %v726
        %1237 = vmatmul.mubr.bf16.gmra.mxu0 %v725
        %v1238 = vpop.f32.mrf.mxu0
        %v1239 = vadd.f32 %v1078, %v1238
        %v1240 = vpop.f32.mrf.mxu0
        %v1241 = vpop.f32.mrf.mxu0
        %v1242 = vadd.f32 %v1081, %v1241
        %v1243 = vpop.f32.mrf.mxu0
        %1244 = vmatprep.mubr.bf16.mxu0 %v730
        %1245 = vmatmul.mubr.bf16.gmra.mxu0 %v729
        %v1246 = vpop.f32.mrf.mxu0
        %v1247 = vadd.f32 %v1086, %v1246
        %v1248 = vpop.f32.mrf.mxu0
        %v1249 = vpop.f32.mrf.mxu0
        %v1250 = vadd.f32 %v1089, %v1249
        %v1251 = vpop.f32.mrf.mxu0
        %1252 = vmatprep.mubr.bf16.mxu0 %v734
        %1253 = vmatmul.mubr.bf16.gmra.mxu0 %v733
        %v1254 = vpop.f32.mrf.mxu0
        %v1255 = vadd.f32 %v1094, %v1254
        %v1256 = vpop.f32.mrf.mxu0
        %v1257 = vpop.f32.mrf.mxu0
        %v1258 = vadd.f32 %v1097, %v1257
        %v1259 = vpop.f32.mrf.mxu0
        %1260 = vmatprep.mubr.bf16.mxu0 %v738
        %1261 = vmatmul.mubr.bf16.gmra.mxu0 %v737
        %v1262 = vpop.f32.mrf.mxu0
        %v1263 = vadd.f32 %v1102, %v1262
        %v1264 = vpop.f32.mrf.mxu0
        %v1265 = vpop.f32.mrf.mxu0
        %v1266 = vadd.f32 %v1105, %v1265
        %v1267 = vpop.f32.mrf.mxu0
        %1268 = vmatprep.mubr.bf16.mxu0 %v742
        %1269 = vmatmul.mubr.bf16.gmra.mxu0 %v741
        %v1270 = vpop.f32.mrf.mxu0
        %v1271 = vadd.f32 %v1110, %v1270
        %v1272 = vpop.f32.mrf.mxu0
        %v1273 = vpop.f32.mrf.mxu0
        %v1274 = vadd.f32 %v1113, %v1273
        %v1275 = vpop.f32.mrf.mxu0
        %1276 = vmatprep.mubr.bf16.mxu0 %v746
        %1277 = vmatmul.mubr.bf16.gmra.mxu0 %v745
        %v1278 = vpop.f32.mrf.mxu0
        %v1279 = vadd.f32 %v1118, %v1278
        %v1280 = vpop.f32.mrf.mxu0
        %v1281 = vpop.f32.mrf.mxu0
        %v1282 = vadd.f32 %v1121, %v1281
        %v1283 = vpop.f32.mrf.mxu0
        %1284 = vmatprep.mubr.bf16.mxu0 %v750
        %1285 = vmatmul.mubr.bf16.gmra.mxu0 %v749
        %v1286 = vpop.f32.mrf.mxu0
        %v1287 = vadd.f32 %v1126, %v1286
        %v1288 = vpop.f32.mrf.mxu0
        %v1289 = vpop.f32.mrf.mxu0
        %v1290 = vadd.f32 %v1129, %v1289
        %v1291 = vpop.f32.mrf.mxu0
        %1292 = vmatprep.mubr.bf16.mxu0 %v754
        %1293 = vmatmul.mubr.bf16.gmra.mxu0 %v753
        %v1294 = vpop.f32.mrf.mxu0
        %v1295 = vadd.f32 %v1134, %v1294
        %v1296 = vpop.f32.mrf.mxu0
        %v1297 = vpop.f32.mrf.mxu0
        %v1298 = vadd.f32 %v1137, %v1297
        %v1299 = vpop.f32.mrf.mxu0
        %1300 = vmatprep.mubr.bf16.mxu0 %v758
        %1301 = vmatmul.mubr.bf16.gmra.mxu0 %v757
        %v1302 = vpop.f32.mrf.mxu0
        %v1303 = vadd.f32 %v1142, %v1302
        %v1304 = vpop.f32.mrf.mxu0
        %v1305 = vpop.f32.mrf.mxu0
        %v1306 = vadd.f32 %v1145, %v1305
        %v1307 = vpop.f32.mrf.mxu0
        %1308 = vmatprep.mubr.bf16.mxu0 %v762
        %1309 = vmatmul.mubr.bf16.gmra.mxu0 %v761
        %v1310 = vpop.f32.mrf.mxu0
        %v1311 = vadd.f32 %v1150, %v1310
        %v1312 = vpop.f32.mrf.mxu0
        %v1313 = vpop.f32.mrf.mxu0
        %v1314 = vadd.f32 %v1153, %v1313
        %v1315 = vpop.f32.mrf.mxu0
        %1316 = vmatprep.mubr.bf16.mxu0 %v766
        %1317 = vmatmul.mubr.bf16.gmra.mxu0 %v765
        %v1318 = vpop.f32.mrf.mxu0
        %v1319 = vadd.f32 %v1158, %v1318
        %v1320 = vpop.f32.mrf.mxu0
        %v1321 = vpop.f32.mrf.mxu0
        %v1322 = vadd.f32 %v1161, %v1321
        %v1323 = vpop.f32.mrf.mxu0
        %1324 = vmatprep.mubr.bf16.mxu0 %v770
        %1325 = vmatmul.mubr.bf16.gmra.mxu0 %v769
        %v1326 = vpop.f32.mrf.mxu0
        %v1327 = vadd.f32 %v1166, %v1326
        %v1328 = vpop.f32.mrf.mxu0
        %v1329 = vpop.f32.mrf.mxu0
        %v1330 = vadd.f32 %v1169, %v1329
        %v1331 = vpop.f32.mrf.mxu0
        %1332 = vmatprep.mubr.bf16.mxu0 %v774
        %1333 = vmatmul.mubr.bf16.gmra.mxu0 %v773
        %v1334 = vpop.f32.mrf.mxu0
        %v1335 = vadd.f32 %v1174, %v1334
        %v1336 = vpop.f32.mrf.mxu0
        %v1337 = vpop.f32.mrf.mxu0
        %v1338 = vadd.f32 %v1177, %v1337
        %v1339 = vpop.f32.mrf.mxu0
        %1340 = vmatprep.mubr.bf16.mxu0 %v778
        %1341 = vmatmul.mubr.bf16.gmra.mxu0 %v777
        %v1342 = vpop.f32.mrf.mxu0
        %v1343 = vadd.f32 %v1182, %v1342
        %v1344 = vpop.f32.mrf.mxu0
        %v1345 = vpop.f32.mrf.mxu0
        %v1346 = vadd.f32 %v1185, %v1345
        %v1347 = vpop.f32.mrf.mxu0
        %1348 = vmatprep.mubr.bf16.mxu0 %v782
        %1349 = vmatmul.mubr.bf16.gmra.mxu0 %v781
        %v1350 = vpop.f32.mrf.mxu0
        %v1351 = vadd.f32 %v1190, %v1350
        %v1352 = vpop.f32.mrf.mxu0
        %v1353 = vpop.f32.mrf.mxu0
        %v1354 = vadd.f32 %v1193, %v1353
        %v1355 = vpop.f32.mrf.mxu0
        %1356 = vmatprep.mubr.bf16.mxu0 %v786
        %1357 = vmatmul.mubr.bf16.gmra.mxu0 %v785
        %v1358 = vpop.f32.mrf.mxu0
        %v1359 = vadd.f32 %v1198, %v1358
        %v1360 = vpop.f32.mrf.mxu0
        %v1361 = vpop.f32.mrf.mxu0
        %v1362 = vadd.f32 %v1201, %v1361
        %v1363 = vpop.f32.mrf.mxu0
        %1364 = vdwg.mxu0
        %v1365 = vadd.f32 %v371, %v1239
        %v1366 = vadd.f32 %v372, %v1242
        %v1367 = vadd.f32 %v373, %v1247
        %v1368 = vadd.f32 %v374, %v1250
        %v1369 = vadd.f32 %v375, %v1255
        %v1370 = vadd.f32 %v376, %v1258
        %v1371 = vadd.f32 %v377, %v1263
        %v1372 = vadd.f32 %v378, %v1266
        %v1373 = vadd.f32 %v379, %v1271
        %v1374 = vadd.f32 %v380, %v1274
        %v1375 = vadd.f32 %v381, %v1279
        %v1376 = vadd.f32 %v382, %v1282
        %v1377 = vadd.f32 %v383, %v1287
        %v1378 = vadd.f32 %v384, %v1290
        %v1379 = vadd.f32 %v385, %v1295
        %v1380 = vadd.f32 %v386, %v1298
        %v1381 = vadd.f32 %v387, %v1303
        %v1382 = vadd.f32 %v388, %v1306
        %v1383 = vadd.f32 %v389, %v1311
        %v1384 = vadd.f32 %v390, %v1314
        %v1385 = vadd.f32 %v391, %v1319
        %v1386 = vadd.f32 %v392, %v1322
        %v1387 = vadd.f32 %v393, %v1327
        %v1388 = vadd.f32 %v394, %v1330
        %v1389 = vadd.f32 %v395, %v1335
        %v1390 = vadd.f32 %v396, %v1338
        %v1391 = vadd.f32 %v397, %v1343
        %v1392 = vadd.f32 %v398, %v1346
        %v1393 = vadd.f32 %v399, %v1351
        %v1394 = vadd.f32 %v400, %v1354
        %v1395 = vadd.f32 %v401, %v1359
        %v1396 = vadd.f32 %v402, %v1362
        %1397 = vst [vmem:[#allocation2] sm:$0xff] %v1365
        %1398 = vst [vmem:[#allocation2 + $0x8] sm:$0xff] %v1366
        %1399 = vst [vmem:[#allocation2 + $0x10] sm:$0xff] %v1367
        %1400 = vst [vmem:[#allocation2 + $0x18] sm:$0xff] %v1368
        %1401 = vst [vmem:[#allocation2 + $0x20] sm:$0xff] %v1369
        %1402 = vst [vmem:[#allocation2 + $0x28] sm:$0xff] %v1370
        %1403 = vst [vmem:[#allocation2 + $0x30] sm:$0xff] %v1371
        %1404 = vst [vmem:[#allocation2 + $0x38] sm:$0xff] %v1372
        %1405 = vst [vmem:[#allocation2 + $0x40] sm:$0xff] %v1373
        %1406 = vst [vmem:[#allocation2 + $0x48] sm:$0xff] %v1374
        %1407 = vst [vmem:[#allocation2 + $0x50] sm:$0xff] %v1375
        %1408 = vst [vmem:[#allocation2 + $0x58] sm:$0xff] %v1376
        %1409 = vst [vmem:[#allocation2 + $0x60] sm:$0xff] %v1377
        %1410 = vst [vmem:[#allocation2 + $0x68] sm:$0xff] %v1378
        %1411 = vst [vmem:[#allocation2 + $0x70] sm:$0xff] %v1379
        %1412 = vst [vmem:[#allocation2 + $0x78] sm:$0xff] %v1380
        %1413 = vst [vmem:[#allocation2 + $0x80] sm:$0xff] %v1381
        %1414 = vst [vmem:[#allocation2 + $0x88] sm:$0xff] %v1382
        %1415 = vst [vmem:[#allocation2 + $0x90] sm:$0xff] %v1383
        %1416 = vst [vmem:[#allocation2 + $0x98] sm:$0xff] %v1384
        %1417 = vst [vmem:[#allocation2 + $0xa0] sm:$0xff] %v1385
        %1418 = vst [vmem:[#allocation2 + $0xa8] sm:$0xff] %v1386
        %1419 = vst [vmem:[#allocation2 + $0xb0] sm:$0xff] %v1387
        %1420 = vst [vmem:[#allocation2 + $0xb8] sm:$0xff] %v1388
        %1421 = vst [vmem:[#allocation2 + $0xc0] sm:$0xff] %v1389
        %1422 = vst [vmem:[#allocation2 + $0xc8] sm:$0xff] %v1390
        %1423 = vst [vmem:[#allocation2 + $0xd0] sm:$0xff] %v1391
        %1424 = vst [vmem:[#allocation2 + $0xd8] sm:$0xff] %v1392
        %1425 = vst [vmem:[#allocation2 + $0xe0] sm:$0xff] %v1393
        %1426 = vst [vmem:[#allocation2 + $0xe8] sm:$0xff] %v1394
        %1427 = vst [vmem:[#allocation2 + $0xf0] sm:$0xff] %v1395
        %1428 = vst [vmem:[#allocation2 + $0xf8] sm:$0xff] %v1396
        // Predicated region
        $region53: #{tpu_custom_call.1} parent=43 // pred_check
          %p1429 = pneg %p335
        $region54: #{tpu_custom_call.1} parent=43 // pred_check_branch
          %1431 = sbr.rel (%p1429) target = $region56
        $region55: #{tpu_custom_call.1} parent=43 // pred_region
          %v1432 = vld [vmem:[#allocation2] sm:$0xff]
          %v1433 = vld [vmem:[#allocation2 + $0x8] sm:$0xff]
          %v1434 = vld [vmem:[#allocation2 + $0x10] sm:$0xff]
          %v1435 = vld [vmem:[#allocation2 + $0x18] sm:$0xff]
          %v1436 = vld [vmem:[#allocation2 + $0x20] sm:$0xff]
          %v1437 = vld [vmem:[#allocation2 + $0x28] sm:$0xff]
          %v1438 = vld [vmem:[#allocation2 + $0x30] sm:$0xff]
          %v1439 = vld [vmem:[#allocation2 + $0x38] sm:$0xff]
          %v1440 = vld [vmem:[#allocation2 + $0x40] sm:$0xff]
          %v1441 = vld [vmem:[#allocation2 + $0x48] sm:$0xff]
          %v1442 = vld [vmem:[#allocation2 + $0x50] sm:$0xff]
          %v1443 = vld [vmem:[#allocation2 + $0x58] sm:$0xff]
          %v1444 = vld [vmem:[#allocation2 + $0x60] sm:$0xff]
          %v1445 = vld [vmem:[#allocation2 + $0x68] sm:$0xff]
          %v1446 = vld [vmem:[#allocation2 + $0x70] sm:$0xff]
          %v1447 = vld [vmem:[#allocation2 + $0x78] sm:$0xff]
          %v1448 = vld [vmem:[#allocation2 + $0x80] sm:$0xff]
          %v1449 = vld [vmem:[#allocation2 + $0x88] sm:$0xff]
          %v1450 = vld [vmem:[#allocation2 + $0x90] sm:$0xff]
          %v1451 = vld [vmem:[#allocation2 + $0x98] sm:$0xff]
          %v1452 = vld [vmem:[#allocation2 + $0xa0] sm:$0xff]
          %v1453 = vld [vmem:[#allocation2 + $0xa8] sm:$0xff]
          %v1454 = vld [vmem:[#allocation2 + $0xb0] sm:$0xff]
          %v1455 = vld [vmem:[#allocation2 + $0xb8] sm:$0xff]
          %v1456 = vld [vmem:[#allocation2 + $0xc0] sm:$0xff]
          %v1457 = vld [vmem:[#allocation2 + $0xc8] sm:$0xff]
          %v1458 = vld [vmem:[#allocation2 + $0xd0] sm:$0xff]
          %v1459 = vld [vmem:[#allocation2 + $0xd8] sm:$0xff]
          %v1460 = vld [vmem:[#allocation2 + $0xe0] sm:$0xff]
          %v1461 = vld [vmem:[#allocation2 + $0xe8] sm:$0xff]
          %v1462 = vld [vmem:[#allocation2 + $0xf0] sm:$0xff]
          %v1463 = vld [vmem:[#allocation2 + $0xf8] sm:$0xff]
          %v1464 = vld [vmem:[%s4] sm:$0x1]
          %v1466 = vlaneseq
          %v1467 = vshrl.u32 %v1466, 7
          %v1468 = vsub.s32 0, %v1467
          %v1469 = vrot.slane %v1464, %v1468
          %v1471 = vadd.f32 %v1432, %v1469
          %v1472 = vadd.f32 %v1433, %v1469
          %v1473 = vadd.f32 %v1434, %v1469
          %v1474 = vadd.f32 %v1435, %v1469
          %v1475 = vadd.f32 %v1436, %v1469
          %v1476 = vadd.f32 %v1437, %v1469
          %v1477 = vadd.f32 %v1438, %v1469
          %v1478 = vadd.f32 %v1439, %v1469
          %v1479 = vadd.f32 %v1440, %v1469
          %v1480 = vadd.f32 %v1441, %v1469
          %v1481 = vadd.f32 %v1442, %v1469
          %v1482 = vadd.f32 %v1443, %v1469
          %v1483 = vadd.f32 %v1444, %v1469
          %v1484 = vadd.f32 %v1445, %v1469
          %v1485 = vadd.f32 %v1446, %v1469
          %v1486 = vadd.f32 %v1447, %v1469
          %v1487 = vadd.f32 %v1448, %v1469
          %v1488 = vadd.f32 %v1449, %v1469
          %v1489 = vadd.f32 %v1450, %v1469
          %v1490 = vadd.f32 %v1451, %v1469
          %v1491 = vadd.f32 %v1452, %v1469
          %v1492 = vadd.f32 %v1453, %v1469
          %v1493 = vadd.f32 %v1454, %v1469
          %v1494 = vadd.f32 %v1455, %v1469
          %v1495 = vadd.f32 %v1456, %v1469
          %v1496 = vadd.f32 %v1457, %v1469
          %v1497 = vadd.f32 %v1458, %v1469
          %v1498 = vadd.f32 %v1459, %v1469
          %v1499 = vadd.f32 %v1460, %v1469
          %v1500 = vadd.f32 %v1461, %v1469
          %v1501 = vadd.f32 %v1462, %v1469
          %v1502 = vadd.f32 %v1463, %v1469
          %vm1503 = vcmp.gt.f32.partialorder %v1471, 0.0
          %vm1504 = vcmp.gt.f32.partialorder %v1472, 0.0
          %vm1505 = vcmp.gt.f32.partialorder %v1473, 0.0
          %vm1506 = vcmp.gt.f32.partialorder %v1474, 0.0
          %vm1507 = vcmp.gt.f32.partialorder %v1475, 0.0
          %vm1508 = vcmp.gt.f32.partialorder %v1476, 0.0
          %vm1509 = vcmp.gt.f32.partialorder %v1477, 0.0
          %vm1510 = vcmp.gt.f32.partialorder %v1478, 0.0
          %vm1511 = vcmp.gt.f32.partialorder %v1479, 0.0
          %vm1512 = vcmp.gt.f32.partialorder %v1480, 0.0
          %vm1513 = vcmp.gt.f32.partialorder %v1481, 0.0
          %vm1514 = vcmp.gt.f32.partialorder %v1482, 0.0
          %vm1515 = vcmp.gt.f32.partialorder %v1483, 0.0
          %vm1516 = vcmp.gt.f32.partialorder %v1484, 0.0
          %vm1517 = vcmp.gt.f32.partialorder %v1485, 0.0
          %vm1518 = vcmp.gt.f32.partialorder %v1486, 0.0
          %vm1519 = vcmp.gt.f32.partialorder %v1487, 0.0
          %vm1520 = vcmp.gt.f32.partialorder %v1488, 0.0
          %vm1521 = vcmp.gt.f32.partialorder %v1489, 0.0
          %vm1522 = vcmp.gt.f32.partialorder %v1490, 0.0
          %vm1523 = vcmp.gt.f32.partialorder %v1491, 0.0
          %vm1524 = vcmp.gt.f32.partialorder %v1492, 0.0
          %vm1525 = vcmp.gt.f32.partialorder %v1493, 0.0
          %vm1526 = vcmp.gt.f32.partialorder %v1494, 0.0
          %vm1527 = vcmp.gt.f32.partialorder %v1495, 0.0
          %vm1528 = vcmp.gt.f32.partialorder %v1496, 0.0
          %vm1529 = vcmp.gt.f32.partialorder %v1497, 0.0
          %vm1530 = vcmp.gt.f32.partialorder %v1498, 0.0
          %vm1531 = vcmp.gt.f32.partialorder %v1499, 0.0
          %vm1532 = vcmp.gt.f32.partialorder %v1500, 0.0
          %vm1533 = vcmp.gt.f32.partialorder %v1501, 0.0
          %vm1534 = vcmp.gt.f32.partialorder %v1502, 0.0
          %v1535 = vmul.f32 %v1471, 0.1
          %v1536 = vmul.f32 %v1472, 0.1
          %v1537 = vmul.f32 %v1473, 0.1
          %v1538 = vmul.f32 %v1474, 0.1
          %v1539 = vmul.f32 %v1475, 0.1
          %v1540 = vmul.f32 %v1476, 0.1
          %v1541 = vmul.f32 %v1477, 0.1
          %v1542 = vmul.f32 %v1478, 0.1
          %v1543 = vmul.f32 %v1479, 0.1
          %v1544 = vmul.f32 %v1480, 0.1
          %v1545 = vmul.f32 %v1481, 0.1
          %v1546 = vmul.f32 %v1482, 0.1
          %v1547 = vmul.f32 %v1483, 0.1
          %v1548 = vmul.f32 %v1484, 0.1
          %v1549 = vmul.f32 %v1485, 0.1
          %v1550 = vmul.f32 %v1486, 0.1
          %v1551 = vmul.f32 %v1487, 0.1
          %v1552 = vmul.f32 %v1488, 0.1
          %v1553 = vmul.f32 %v1489, 0.1
          %v1554 = vmul.f32 %v1490, 0.1
          %v1555 = vmul.f32 %v1491, 0.1
          %v1556 = vmul.f32 %v1492, 0.1
          %v1557 = vmul.f32 %v1493, 0.1
          %v1558 = vmul.f32 %v1494, 0.1
          %v1559 = vmul.f32 %v1495, 0.1
          %v1560 = vmul.f32 %v1496, 0.1
          %v1561 = vmul.f32 %v1497, 0.1
          %v1562 = vmul.f32 %v1498, 0.1
          %v1563 = vmul.f32 %v1499, 0.1
          %v1564 = vmul.f32 %v1500, 0.1
          %v1565 = vmul.f32 %v1501, 0.1
          %v1566 = vmul.f32 %v1502, 0.1
          %v1567 = vsel %vm1503, %v1471, %v1535
          %v1568 = vsel %vm1504, %v1472, %v1536
          %v1569 = vsel %vm1505, %v1473, %v1537
          %v1570 = vsel %vm1506, %v1474, %v1538
          %v1571 = vsel %vm1507, %v1475, %v1539
          %v1572 = vsel %vm1508, %v1476, %v1540
          %v1573 = vsel %vm1509, %v1477, %v1541
          %v1574 = vsel %vm1510, %v1478, %v1542
          %v1575 = vsel %vm1511, %v1479, %v1543
          %v1576 = vsel %vm1512, %v1480, %v1544
          %v1577 = vsel %vm1513, %v1481, %v1545
          %v1578 = vsel %vm1514, %v1482, %v1546
          %v1579 = vsel %vm1515, %v1483, %v1547
          %v1580 = vsel %vm1516, %v1484, %v1548
          %v1581 = vsel %vm1517, %v1485, %v1549
          %v1582 = vsel %vm1518, %v1486, %v1550
          %v1583 = vsel %vm1519, %v1487, %v1551
          %v1584 = vsel %vm1520, %v1488, %v1552
          %v1585 = vsel %vm1521, %v1489, %v1553
          %v1586 = vsel %vm1522, %v1490, %v1554
          %v1587 = vsel %vm1523, %v1491, %v1555
          %v1588 = vsel %vm1524, %v1492, %v1556
          %v1589 = vsel %vm1525, %v1493, %v1557
          %v1590 = vsel %vm1526, %v1494, %v1558
          %v1591 = vsel %vm1527, %v1495, %v1559
          %v1592 = vsel %vm1528, %v1496, %v1560
          %v1593 = vsel %vm1529, %v1497, %v1561
          %v1594 = vsel %vm1530, %v1498, %v1562
          %v1595 = vsel %vm1531, %v1499, %v1563
          %v1596 = vsel %vm1532, %v1500, %v1564
          %v1597 = vsel %vm1533, %v1501, %v1565
          %v1598 = vsel %vm1534, %v1502, %v1566
          %v1599 = vld [vmem:[%s331] sm:$0xff]
          %v1600 = vld [vmem:[%s331 + $0x8] sm:$0xff]
          %v1601 = vld [vmem:[%s331 + $0x10] sm:$0xff]
          %v1602 = vld [vmem:[%s331 + $0x18] sm:$0xff]
          %v1603 = vld [vmem:[%s331 + $0x20] sm:$0xff]
          %v1604 = vld [vmem:[%s331 + $0x28] sm:$0xff]
          %v1605 = vld [vmem:[%s331 + $0x30] sm:$0xff]
          %v1606 = vld [vmem:[%s331 + $0x38] sm:$0xff]
          %v1607 = vld [vmem:[%s331 + $0x40] sm:$0xff]
          %v1608 = vld [vmem:[%s331 + $0x48] sm:$0xff]
          %v1609 = vld [vmem:[%s331 + $0x50] sm:$0xff]
          %v1610 = vld [vmem:[%s331 + $0x58] sm:$0xff]
          %v1611 = vld [vmem:[%s331 + $0x60] sm:$0xff]
          %v1612 = vld [vmem:[%s331 + $0x68] sm:$0xff]
          %v1613 = vld [vmem:[%s331 + $0x70] sm:$0xff]
          %v1614 = vld [vmem:[%s331 + $0x78] sm:$0xff]
          %v1615 = vld [vmem:[%s331 + $0x80] sm:$0xff]
          %v1616 = vld [vmem:[%s331 + $0x88] sm:$0xff]
          %v1617 = vld [vmem:[%s331 + $0x90] sm:$0xff]
          %v1618 = vld [vmem:[%s331 + $0x98] sm:$0xff]
          %v1619 = vld [vmem:[%s331 + $0xa0] sm:$0xff]
          %v1620 = vld [vmem:[%s331 + $0xa8] sm:$0xff]
          %v1621 = vld [vmem:[%s331 + $0xb0] sm:$0xff]
          %v1622 = vld [vmem:[%s331 + $0xb8] sm:$0xff]
          %v1623 = vld [vmem:[%s331 + $0xc0] sm:$0xff]
          %v1624 = vld [vmem:[%s331 + $0xc8] sm:$0xff]
          %v1625 = vld [vmem:[%s331 + $0xd0] sm:$0xff]
          %v1626 = vld [vmem:[%s331 + $0xd8] sm:$0xff]
          %v1627 = vld [vmem:[%s331 + $0xe0] sm:$0xff]
          %v1628 = vld [vmem:[%s331 + $0xe8] sm:$0xff]
          %v1629 = vld [vmem:[%s331 + $0xf0] sm:$0xff]
          %v1630 = vld [vmem:[%s331 + $0xf8] sm:$0xff]
          %v1631 = vld [vmem:[%s3] sm:$0xff]
          %v1632 = vld [vmem:[%s3 + $0x8] sm:$0xff]
          %v1633 = vld [vmem:[%s5] sm:$0x1]
          %v1635 = vlaneseq
          %v1636 = vshrl.u32 %v1635, 7
          %v1637 = vsub.s32 0, %v1636
          %v1638 = vrot.slane %v1633, %v1637
          %vm1640 = vcmask 130048
          %v1642 = vsel %vm1640, %v1599, 0
          %v1645 = vsel %vm1640, %v1600, 0
          %v1648 = vsel %vm1640, %v1601, 0
          %v1651 = vsel %vm1640, %v1602, 0
          %v1654 = vsel %vm1640, %v1603, 0
          %v1657 = vsel %vm1640, %v1604, 0
          %v1660 = vsel %vm1640, %v1605, 0
          %v1663 = vsel %vm1640, %v1606, 0
          %v1666 = vsel %vm1640, %v1607, 0
          %v1669 = vsel %vm1640, %v1608, 0
          %v1672 = vsel %vm1640, %v1609, 0
          %v1675 = vsel %vm1640, %v1610, 0
          %v1678 = vsel %vm1640, %v1611, 0
          %v1681 = vsel %vm1640, %v1612, 0
          %v1684 = vsel %vm1640, %v1613, 0
          %v1687 = vsel %vm1640, %v1614, 0
          %v1690 = vsel %vm1640, %v1615, 0
          %v1693 = vsel %vm1640, %v1616, 0
          %v1696 = vsel %vm1640, %v1617, 0
          %v1699 = vsel %vm1640, %v1618, 0
          %v1702 = vsel %vm1640, %v1619, 0
          %v1705 = vsel %vm1640, %v1620, 0
          %v1708 = vsel %vm1640, %v1621, 0
          %v1711 = vsel %vm1640, %v1622, 0
          %v1714 = vsel %vm1640, %v1623, 0
          %v1717 = vsel %vm1640, %v1624, 0
          %v1720 = vsel %vm1640, %v1625, 0
          %v1723 = vsel %vm1640, %v1626, 0
          %v1726 = vsel %vm1640, %v1627, 0
          %v1729 = vsel %vm1640, %v1628, 0
          %v1732 = vsel %vm1640, %v1629, 0
          %v1735 = vsel %vm1640, %v1630, 0
          %1737 = vmatprep.subr.mxu0 0.0
          %1738 = vmatpush1.msra.mxu0 0.0
          %1739 = vmatprep.subr.mxu0 0.0
          %1740 = vmatpush1.msra.mxu0 0.0
          %1741 = vmatprep.subr.mxu0 0.0
          %1742 = vmatpush1.msra.mxu0 0.0
          %1743 = vmatprep.subr.mxu0 0.0
          %1744 = vmatpush1.msra.mxu0 0.0
          %1745 = vmatprep.subr.mxu0 0.0
          %1746 = vmatpush1.msra.mxu0 0.0
          %1747 = vmatprep.subr.mxu0 0.0
          %1748 = vmatpush1.msra.mxu0 0.0
          %1749 = vmatprep.subr.mxu0 0.0
          %1750 = vmatpush1.msra.mxu0 0.0
          %1751 = vmatprep.subr.mxu0 0.0
          %1752 = vmatpush1.msra.mxu0 0.0
          %1753 = vmatprep.subr.mxu0 0.0
          %1754 = vmatpush1.msra.mxu0 0.0
          %1755 = vmatprep.subr.mxu0 0.0
          %1756 = vmatpush1.msra.mxu0 0.0
          %1757 = vmatprep.subr.mxu0 0.0
          %1758 = vmatpush1.msra.mxu0 0.0
          %1759 = vmatprep.subr.mxu0 0.0
          %1760 = vmatpush1.msra.mxu0 0.0
          %1761 = vmatprep.subr.mxu0 0.0
          %1762 = vmatpush1.msra.mxu0 0.0
          %1763 = vmatprep.subr.mxu0 0.0
          %1764 = vmatpush1.msra.mxu0 0.0
          %1765 = vmatprep.subr.mxu0 0.0
          %1766 = vmatpush1.msra.mxu0 %v1632
          %1767 = vmatprep.subr.mxu0 0.0
          %1768 = vmatpush1.msra.mxu0 %v1631
          %1769 = vmatprep.subr.mxu0 0.0
          %1770 = vmatpush2.msra.mxu0 0.0
          %1771 = vmatprep.subr.mxu0 0.0
          %1772 = vmatpush2.msra.mxu0 0.0
          %1773 = vmatprep.subr.mxu0 0.0
          %1774 = vmatpush2.msra.mxu0 0.0
          %1775 = vmatprep.subr.mxu0 0.0
          %1776 = vmatpush2.msra.mxu0 0.0
          %1777 = vmatprep.subr.mxu0 0.0
          %1778 = vmatpush2.msra.mxu0 0.0
          %1779 = vmatprep.subr.mxu0 0.0
          %1780 = vmatpush2.msra.mxu0 0.0
          %1781 = vmatprep.subr.mxu0 0.0
          %1782 = vmatpush2.msra.mxu0 0.0
          %1783 = vmatprep.subr.mxu0 0.0
          %1784 = vmatpush2.msra.mxu0 0.0
          %1785 = vmatprep.subr.mxu0 0.0
          %1786 = vmatpush2.msra.mxu0 0.0
          %1787 = vmatprep.subr.mxu0 0.0
          %1788 = vmatpush2.msra.mxu0 0.0
          %1789 = vmatprep.subr.mxu0 0.0
          %1790 = vmatpush2.msra.mxu0 0.0
          %1791 = vmatprep.subr.mxu0 0.0
          %1792 = vmatpush2.msra.mxu0 0.0
          %1793 = vmatprep.subr.mxu0 0.0
          %1794 = vmatpush2.msra.mxu0 0.0
          %1795 = vmatprep.subr.mxu0 0.0
          %1796 = vmatpush2.msra.mxu0 0.0
          %1797 = vmatprep.subr.mxu0 0.0
          %1798 = vmatpush2.msra.mxu0 0.0
          %1799 = vmatprep.subr.mxu0 0.0
          %1800 = vmatpush2.msra.mxu0 0.0
          %1801 = vmatprep.mubr.f32.mxu0 0.0
          %1802 = vmatmul.mubr.f32.gmra.mxu0 %v1642
          %v1803 = vpop.f32.mrf.mxu0
          %v1804 = vadd.f32 %v1638, %v1803
          %v1805 = vpop.f32.mrf.mxu0
          %1806 = vmatprep.mubr.f32.mxu0 0.0
          %1807 = vmatmul.mubr.f32.gmra.mxu0 %v1645
          %v1808 = vpop.f32.mrf.mxu0
          %v1809 = vadd.f32 %v1638, %v1808
          %v1810 = vpop.f32.mrf.mxu0
          %1811 = vmatprep.mubr.f32.mxu0 0.0
          %1812 = vmatmul.mubr.f32.gmra.mxu0 %v1648
          %v1813 = vpop.f32.mrf.mxu0
          %v1814 = vadd.f32 %v1638, %v1813
          %v1815 = vpop.f32.mrf.mxu0
          %1816 = vmatprep.mubr.f32.mxu0 0.0
          %1817 = vmatmul.mubr.f32.gmra.mxu0 %v1651
          %v1818 = vpop.f32.mrf.mxu0
          %v1819 = vadd.f32 %v1638, %v1818
          %v1820 = vpop.f32.mrf.mxu0
          %1821 = vmatprep.mubr.f32.mxu0 0.0
          %1822 = vmatmul.mubr.f32.gmra.mxu0 %v1654
          %v1823 = vpop.f32.mrf.mxu0
          %v1824 = vadd.f32 %v1638, %v1823
          %v1825 = vpop.f32.mrf.mxu0
          %1826 = vmatprep.mubr.f32.mxu0 0.0
          %1827 = vmatmul.mubr.f32.gmra.mxu0 %v1657
          %v1828 = vpop.f32.mrf.mxu0
          %v1829 = vadd.f32 %v1638, %v1828
          %v1830 = vpop.f32.mrf.mxu0
          %1831 = vmatprep.mubr.f32.mxu0 0.0
          %1832 = vmatmul.mubr.f32.gmra.mxu0 %v1660
          %v1833 = vpop.f32.mrf.mxu0
          %v1834 = vadd.f32 %v1638, %v1833
          %v1835 = vpop.f32.mrf.mxu0
          %1836 = vmatprep.mubr.f32.mxu0 0.0
          %1837 = vmatmul.mubr.f32.gmra.mxu0 %v1663
          %v1838 = vpop.f32.mrf.mxu0
          %v1839 = vadd.f32 %v1638, %v1838
          %v1840 = vpop.f32.mrf.mxu0
          %1841 = vmatprep.mubr.f32.mxu0 0.0
          %1842 = vmatmul.mubr.f32.gmra.mxu0 %v1666
          %v1843 = vpop.f32.mrf.mxu0
          %v1844 = vadd.f32 %v1638, %v1843
          %v1845 = vpop.f32.mrf.mxu0
          %1846 = vmatprep.mubr.f32.mxu0 0.0
          %1847 = vmatmul.mubr.f32.gmra.mxu0 %v1669
          %v1848 = vpop.f32.mrf.mxu0
          %v1849 = vadd.f32 %v1638, %v1848
          %v1850 = vpop.f32.mrf.mxu0
          %1851 = vmatprep.mubr.f32.mxu0 0.0
          %1852 = vmatmul.mubr.f32.gmra.mxu0 %v1672
          %v1853 = vpop.f32.mrf.mxu0
          %v1854 = vadd.f32 %v1638, %v1853
          %v1855 = vpop.f32.mrf.mxu0
          %1856 = vmatprep.mubr.f32.mxu0 0.0
          %1857 = vmatmul.mubr.f32.gmra.mxu0 %v1675
          %v1858 = vpop.f32.mrf.mxu0
          %v1859 = vadd.f32 %v1638, %v1858
          %v1860 = vpop.f32.mrf.mxu0
          %1861 = vmatprep.mubr.f32.mxu0 0.0
          %1862 = vmatmul.mubr.f32.gmra.mxu0 %v1678
          %v1863 = vpop.f32.mrf.mxu0
          %v1864 = vadd.f32 %v1638, %v1863
          %v1865 = vpop.f32.mrf.mxu0
          %1866 = vmatprep.mubr.f32.mxu0 0.0
          %1867 = vmatmul.mubr.f32.gmra.mxu0 %v1681
          %v1868 = vpop.f32.mrf.mxu0
          %v1869 = vadd.f32 %v1638, %v1868
          %v1870 = vpop.f32.mrf.mxu0
          %1871 = vmatprep.mubr.f32.mxu0 0.0
          %1872 = vmatmul.mubr.f32.gmra.mxu0 %v1684
          %v1873 = vpop.f32.mrf.mxu0
          %v1874 = vadd.f32 %v1638, %v1873
          %v1875 = vpop.f32.mrf.mxu0
          %1876 = vmatprep.mubr.f32.mxu0 0.0
          %1877 = vmatmul.mubr.f32.gmra.mxu0 %v1687
          %v1878 = vpop.f32.mrf.mxu0
          %v1879 = vadd.f32 %v1638, %v1878
          %v1880 = vpop.f32.mrf.mxu0
          %1881 = vmatprep.mubr.f32.mxu0 0.0
          %1882 = vmatmul.mubr.f32.gmra.mxu0 %v1690
          %v1883 = vpop.f32.mrf.mxu0
          %v1884 = vadd.f32 %v1638, %v1883
          %v1885 = vpop.f32.mrf.mxu0
          %1886 = vmatprep.mubr.f32.mxu0 0.0
          %1887 = vmatmul.mubr.f32.gmra.mxu0 %v1693
          %v1888 = vpop.f32.mrf.mxu0
          %v1889 = vadd.f32 %v1638, %v1888
          %v1890 = vpop.f32.mrf.mxu0
          %1891 = vmatprep.mubr.f32.mxu0 0.0
          %1892 = vmatmul.mubr.f32.gmra.mxu0 %v1696
          %v1893 = vpop.f32.mrf.mxu0
          %v1894 = vadd.f32 %v1638, %v1893
          %v1895 = vpop.f32.mrf.mxu0
          %1896 = vmatprep.mubr.f32.mxu0 0.0
          %1897 = vmatmul.mubr.f32.gmra.mxu0 %v1699
          %v1898 = vpop.f32.mrf.mxu0
          %v1899 = vadd.f32 %v1638, %v1898
          %v1900 = vpop.f32.mrf.mxu0
          %1901 = vmatprep.mubr.f32.mxu0 0.0
          %1902 = vmatmul.mubr.f32.gmra.mxu0 %v1702
          %v1903 = vpop.f32.mrf.mxu0
          %v1904 = vadd.f32 %v1638, %v1903
          %v1905 = vpop.f32.mrf.mxu0
          %1906 = vmatprep.mubr.f32.mxu0 0.0
          %1907 = vmatmul.mubr.f32.gmra.mxu0 %v1705
          %v1908 = vpop.f32.mrf.mxu0
          %v1909 = vadd.f32 %v1638, %v1908
          %v1910 = vpop.f32.mrf.mxu0
          %1911 = vmatprep.mubr.f32.mxu0 0.0
          %1912 = vmatmul.mubr.f32.gmra.mxu0 %v1708
          %v1913 = vpop.f32.mrf.mxu0
          %v1914 = vadd.f32 %v1638, %v1913
          %v1915 = vpop.f32.mrf.mxu0
          %1916 = vmatprep.mubr.f32.mxu0 0.0
          %1917 = vmatmul.mubr.f32.gmra.mxu0 %v1711
          %v1918 = vpop.f32.mrf.mxu0
          %v1919 = vadd.f32 %v1638, %v1918
          %v1920 = vpop.f32.mrf.mxu0
          %1921 = vmatprep.mubr.f32.mxu0 0.0
          %1922 = vmatmul.mubr.f32.gmra.mxu0 %v1714
          %v1923 = vpop.f32.mrf.mxu0
          %v1924 = vadd.f32 %v1638, %v1923
          %v1925 = vpop.f32.mrf.mxu0
          %1926 = vmatprep.mubr.f32.mxu0 0.0
          %1927 = vmatmul.mubr.f32.gmra.mxu0 %v1717
          %v1928 = vpop.f32.mrf.mxu0
          %v1929 = vadd.f32 %v1638, %v1928
          %v1930 = vpop.f32.mrf.mxu0
          %1931 = vmatprep.mubr.f32.mxu0 0.0
          %1932 = vmatmul.mubr.f32.gmra.mxu0 %v1720
          %v1933 = vpop.f32.mrf.mxu0
          %v1934 = vadd.f32 %v1638, %v1933
          %v1935 = vpop.f32.mrf.mxu0
          %1936 = vmatprep.mubr.f32.mxu0 0.0
          %1937 = vmatmul.mubr.f32.gmra.mxu0 %v1723
          %v1938 = vpop.f32.mrf.mxu0
          %v1939 = vadd.f32 %v1638, %v1938
          %v1940 = vpop.f32.mrf.mxu0
          %1941 = vmatprep.mubr.f32.mxu0 0.0
          %1942 = vmatmul.mubr.f32.gmra.mxu0 %v1726
          %v1943 = vpop.f32.mrf.mxu0
          %v1944 = vadd.f32 %v1638, %v1943
          %v1945 = vpop.f32.mrf.mxu0
          %1946 = vmatprep.mubr.f32.mxu0 0.0
          %1947 = vmatmul.mubr.f32.gmra.mxu0 %v1729
          %v1948 = vpop.f32.mrf.mxu0
          %v1949 = vadd.f32 %v1638, %v1948
          %v1950 = vpop.f32.mrf.mxu0
          %1951 = vmatprep.mubr.f32.mxu0 0.0
          %1952 = vmatmul.mubr.f32.gmra.mxu0 %v1732
          %v1953 = vpop.f32.mrf.mxu0
          %v1954 = vadd.f32 %v1638, %v1953
          %v1955 = vpop.f32.mrf.mxu0
          %1956 = vmatprep.mubr.f32.mxu0 0.0
          %1957 = vmatmul.mubr.f32.gmra.mxu0 %v1735
          %v1958 = vpop.f32.mrf.mxu0
          %v1959 = vadd.f32 %v1638, %v1958
          %v1960 = vpop.f32.mrf.mxu0
          %1961 = vdwg.mxu0
          %v1962 = vadd.f32 %v1567, %v1804
          %v1963 = vadd.f32 %v1568, %v1809
          %v1964 = vadd.f32 %v1569, %v1814
          %v1965 = vadd.f32 %v1570, %v1819
          %v1966 = vadd.f32 %v1571, %v1824
          %v1967 = vadd.f32 %v1572, %v1829
          %v1968 = vadd.f32 %v1573, %v1834
          %v1969 = vadd.f32 %v1574, %v1839
          %v1970 = vadd.f32 %v1575, %v1844
          %v1971 = vadd.f32 %v1576, %v1849
          %v1972 = vadd.f32 %v1577, %v1854
          %v1973 = vadd.f32 %v1578, %v1859
          %v1974 = vadd.f32 %v1579, %v1864
          %v1975 = vadd.f32 %v1580, %v1869
          %v1976 = vadd.f32 %v1581, %v1874
          %v1977 = vadd.f32 %v1582, %v1879
          %v1978 = vadd.f32 %v1583, %v1884
          %v1979 = vadd.f32 %v1584, %v1889
          %v1980 = vadd.f32 %v1585, %v1894
          %v1981 = vadd.f32 %v1586, %v1899
          %v1982 = vadd.f32 %v1587, %v1904
          %v1983 = vadd.f32 %v1588, %v1909
          %v1984 = vadd.f32 %v1589, %v1914
          %v1985 = vadd.f32 %v1590, %v1919
          %v1986 = vadd.f32 %v1591, %v1924
          %v1987 = vadd.f32 %v1592, %v1929
          %v1988 = vadd.f32 %v1593, %v1934
          %v1989 = vadd.f32 %v1594, %v1939
          %v1990 = vadd.f32 %v1595, %v1944
          %v1991 = vadd.f32 %v1596, %v1949
          %v1992 = vadd.f32 %v1597, %v1954
          %v1993 = vadd.f32 %v1598, %v1959
          %vm1994 = vcmp.gt.f32.partialorder %v1962, 0.0
          %vm1995 = vcmp.gt.f32.partialorder %v1963, 0.0
          %vm1996 = vcmp.gt.f32.partialorder %v1964, 0.0
          %vm1997 = vcmp.gt.f32.partialorder %v1965, 0.0
          %vm1998 = vcmp.gt.f32.partialorder %v1966, 0.0
          %vm1999 = vcmp.gt.f32.partialorder %v1967, 0.0
          %vm2000 = vcmp.gt.f32.partialorder %v1968, 0.0
          %vm2001 = vcmp.gt.f32.partialorder %v1969, 0.0
          %vm2002 = vcmp.gt.f32.partialorder %v1970, 0.0
          %vm2003 = vcmp.gt.f32.partialorder %v1971, 0.0
          %vm2004 = vcmp.gt.f32.partialorder %v1972, 0.0
          %vm2005 = vcmp.gt.f32.partialorder %v1973, 0.0
          %vm2006 = vcmp.gt.f32.partialorder %v1974, 0.0
          %vm2007 = vcmp.gt.f32.partialorder %v1975, 0.0
          %vm2008 = vcmp.gt.f32.partialorder %v1976, 0.0
          %vm2009 = vcmp.gt.f32.partialorder %v1977, 0.0
          %vm2010 = vcmp.gt.f32.partialorder %v1978, 0.0
          %vm2011 = vcmp.gt.f32.partialorder %v1979, 0.0
          %vm2012 = vcmp.gt.f32.partialorder %v1980, 0.0
          %vm2013 = vcmp.gt.f32.partialorder %v1981, 0.0
          %vm2014 = vcmp.gt.f32.partialorder %v1982, 0.0
          %vm2015 = vcmp.gt.f32.partialorder %v1983, 0.0
          %vm2016 = vcmp.gt.f32.partialorder %v1984, 0.0
          %vm2017 = vcmp.gt.f32.partialorder %v1985, 0.0
          %vm2018 = vcmp.gt.f32.partialorder %v1986, 0.0
          %vm2019 = vcmp.gt.f32.partialorder %v1987, 0.0
          %vm2020 = vcmp.gt.f32.partialorder %v1988, 0.0
          %vm2021 = vcmp.gt.f32.partialorder %v1989, 0.0
          %vm2022 = vcmp.gt.f32.partialorder %v1990, 0.0
          %vm2023 = vcmp.gt.f32.partialorder %v1991, 0.0
          %vm2024 = vcmp.gt.f32.partialorder %v1992, 0.0
          %vm2025 = vcmp.gt.f32.partialorder %v1993, 0.0
          %v2026 = vmul.f32 %v1962, 0.1
          %v2027 = vmul.f32 %v1963, 0.1
          %v2028 = vmul.f32 %v1964, 0.1
          %v2029 = vmul.f32 %v1965, 0.1
          %v2030 = vmul.f32 %v1966, 0.1
          %v2031 = vmul.f32 %v1967, 0.1
          %v2032 = vmul.f32 %v1968, 0.1
          %v2033 = vmul.f32 %v1969, 0.1
          %v2034 = vmul.f32 %v1970, 0.1
          %v2035 = vmul.f32 %v1971, 0.1
          %v2036 = vmul.f32 %v1972, 0.1
          %v2037 = vmul.f32 %v1973, 0.1
          %v2038 = vmul.f32 %v1974, 0.1
          %v2039 = vmul.f32 %v1975, 0.1
          %v2040 = vmul.f32 %v1976, 0.1
          %v2041 = vmul.f32 %v1977, 0.1
          %v2042 = vmul.f32 %v1978, 0.1
          %v2043 = vmul.f32 %v1979, 0.1
          %v2044 = vmul.f32 %v1980, 0.1
          %v2045 = vmul.f32 %v1981, 0.1
          %v2046 = vmul.f32 %v1982, 0.1
          %v2047 = vmul.f32 %v1983, 0.1
          %v2048 = vmul.f32 %v1984, 0.1
          %v2049 = vmul.f32 %v1985, 0.1
          %v2050 = vmul.f32 %v1986, 0.1
          %v2051 = vmul.f32 %v1987, 0.1
          %v2052 = vmul.f32 %v1988, 0.1
          %v2053 = vmul.f32 %v1989, 0.1
          %v2054 = vmul.f32 %v1990, 0.1
          %v2055 = vmul.f32 %v1991, 0.1
          %v2056 = vmul.f32 %v1992, 0.1
          %v2057 = vmul.f32 %v1993, 0.1
          %v2058 = vsel %vm1994, %v1962, %v2026
          %v2059 = vsel %vm1995, %v1963, %v2027
          %v2060 = vsel %vm1996, %v1964, %v2028
          %v2061 = vsel %vm1997, %v1965, %v2029
          %v2062 = vsel %vm1998, %v1966, %v2030
          %v2063 = vsel %vm1999, %v1967, %v2031
          %v2064 = vsel %vm2000, %v1968, %v2032
          %v2065 = vsel %vm2001, %v1969, %v2033
          %v2066 = vsel %vm2002, %v1970, %v2034
          %v2067 = vsel %vm2003, %v1971, %v2035
          %v2068 = vsel %vm2004, %v1972, %v2036
          %v2069 = vsel %vm2005, %v1973, %v2037
          %v2070 = vsel %vm2006, %v1974, %v2038
          %v2071 = vsel %vm2007, %v1975, %v2039
          %v2072 = vsel %vm2008, %v1976, %v2040
          %v2073 = vsel %vm2009, %v1977, %v2041
          %v2074 = vsel %vm2010, %v1978, %v2042
          %v2075 = vsel %vm2011, %v1979, %v2043
          %v2076 = vsel %vm2012, %v1980, %v2044
          %v2077 = vsel %vm2013, %v1981, %v2045
          %v2078 = vsel %vm2014, %v1982, %v2046
          %v2079 = vsel %vm2015, %v1983, %v2047
          %v2080 = vsel %vm2016, %v1984, %v2048
          %v2081 = vsel %vm2017, %v1985, %v2049
          %v2082 = vsel %vm2018, %v1986, %v2050
          %v2083 = vsel %vm2019, %v1987, %v2051
          %v2084 = vsel %vm2020, %v1988, %v2052
          %v2085 = vsel %vm2021, %v1989, %v2053
          %v2086 = vsel %vm2022, %v1990, %v2054
          %v2087 = vsel %vm2023, %v1991, %v2055
          %v2088 = vsel %vm2024, %v1992, %v2056
          %v2089 = vsel %vm2025, %v1993, %v2057
          %2090 = vst [vmem:[%s318] sm:$0xff] %v2058
          %2091 = vst [vmem:[%s318 + $0x8] sm:$0xff] %v2059
          %2092 = vst [vmem:[%s318 + $0x10] sm:$0xff] %v2060
          %2093 = vst [vmem:[%s318 + $0x18] sm:$0xff] %v2061
          %2094 = vst [vmem:[%s318 + $0x20] sm:$0xff] %v2062
          %2095 = vst [vmem:[%s318 + $0x28] sm:$0xff] %v2063
          %2096 = vst [vmem:[%s318 + $0x30] sm:$0xff] %v2064
          %2097 = vst [vmem:[%s318 + $0x38] sm:$0xff] %v2065
          %2098 = vst [vmem:[%s318 + $0x40] sm:$0xff] %v2066
          %2099 = vst [vmem:[%s318 + $0x48] sm:$0xff] %v2067
          %2100 = vst [vmem:[%s318 + $0x50] sm:$0xff] %v2068
          %2101 = vst [vmem:[%s318 + $0x58] sm:$0xff] %v2069
          %2102 = vst [vmem:[%s318 + $0x60] sm:$0xff] %v2070
          %2103 = vst [vmem:[%s318 + $0x68] sm:$0xff] %v2071
          %2104 = vst [vmem:[%s318 + $0x70] sm:$0xff] %v2072
          %2105 = vst [vmem:[%s318 + $0x78] sm:$0xff] %v2073
          %2106 = vst [vmem:[%s318 + $0x80] sm:$0xff] %v2074
          %2107 = vst [vmem:[%s318 + $0x88] sm:$0xff] %v2075
          %2108 = vst [vmem:[%s318 + $0x90] sm:$0xff] %v2076
          %2109 = vst [vmem:[%s318 + $0x98] sm:$0xff] %v2077
          %2110 = vst [vmem:[%s318 + $0xa0] sm:$0xff] %v2078
          %2111 = vst [vmem:[%s318 + $0xa8] sm:$0xff] %v2079
          %2112 = vst [vmem:[%s318 + $0xb0] sm:$0xff] %v2080
          %2113 = vst [vmem:[%s318 + $0xb8] sm:$0xff] %v2081
          %2114 = vst [vmem:[%s318 + $0xc0] sm:$0xff] %v2082
          %2115 = vst [vmem:[%s318 + $0xc8] sm:$0xff] %v2083
          %2116 = vst [vmem:[%s318 + $0xd0] sm:$0xff] %v2084
          %2117 = vst [vmem:[%s318 + $0xd8] sm:$0xff] %v2085
          %2118 = vst [vmem:[%s318 + $0xe0] sm:$0xff] %v2086
          %2119 = vst [vmem:[%s318 + $0xe8] sm:$0xff] %v2087
          %2120 = vst [vmem:[%s318 + $0xf0] sm:$0xff] %v2088
          %2121 = vst [vmem:[%s318 + $0xf8] sm:$0xff] %v2089
        $region56: #{tpu_custom_call.1} parent=43 // pred_fallthru
          _
        %s2122 = sand.u32 %s186, 1
        %s2123 = scalar_lea.sflag [#allocation5], %s2122
        %s2124 = sand.u32 %s186, 1
        %s2125 = smul.addr %s2124, 256
        %s2126 = scalar_lea.vmem [#allocation6], %s2125
        // Predicated region
        $region57: #{tpu_custom_call.1} parent=43 // pred_check
          %p2127 = pneg %p196
        $region58: #{tpu_custom_call.1} parent=43 // pred_check_branch
          %2129 = sbr.rel (%p2127) target = $region60
        $region59: #{tpu_custom_call.1} parent=43 // pred_region
          %s2130 = smul.u32 32, %s27
          %s2132 = ssub.s32 4096, 4096
          %2133 = vsyncadd %s2123, %s2132
          %s2134 = smul.addr %s2130, 128
          %s2135 = scalar_lea.hbm %s6, %s2134
          %s2136 = sshll.u32 %s2126, 4
          %s2137 = int_to_ptr.vmem [resolvable:$true] %s2136
          %2142 = dma.vmem_to_hbm [thread:$0]  %s2137, 4096, %s2135, %s2123, 128, 128, 8
        $region60: #{tpu_custom_call.1} parent=43 // pred_fallthru
          _
      $region44: #{tpu_custom_call.1} parent=5 // pred_fallthru
        _
      %p2143 = scmp.le.s32.totalorder 2, %s18
      // Predicated region
      $region61: #{tpu_custom_call.1} parent=5 // pred_check
        %p2144 = pneg %p2143
      $region62: #{tpu_custom_call.1} parent=5 // pred_check_branch
        %2146 = sbr.rel (%p2144) target = $region64
      $region63: #{tpu_custom_call.1} parent=5 // pred_region
        %s2147 = ssub.s32 %s18, 2
        // Predicated region
        $region65: #{tpu_custom_call.1} parent=63 // pred_check
          %p2148 = pneg %p202
        $region66: #{tpu_custom_call.1} parent=63 // pred_check_branch
          %2150 = sbr.rel (%p2148) target = $region68
        $region67: #{tpu_custom_call.1} parent=63 // pred_region
          %s2151 = sand.u32 %s187, 1
          %s2152 = scalar_lea.sflag [#allocation5], %s2151
          %s2153 = sand.u32 %s187, 1
          %s2154 = smul.addr %s2153, 256
          %s2155 = scalar_lea.vmem [#allocation6], %s2154
          %2156 = dma.done %s2152, 4096
        $region68: #{tpu_custom_call.1} parent=63 // pred_fallthru
          _
      $region64: #{tpu_custom_call.1} parent=5 // pred_fallthru
        _
    $region6: #{tpu_custom_call.1} parent=1 // loop_footer
      %s22 = sadd.s32 1, %s18
    $region7: #{tpu_custom_call.1} parent=1 // loop_footer_branch
      %17 = sbr.rel target = $region3
    $region8: #{tpu_custom_call.1} parent=1 // loop_exit
      _
    %2157 = vsyncpa [#allocation4], 1
    %s2158 = scalar_lea.sflag [#allocation4], 1
    %2159 = vsyncpa %s2158, 1
    %2160 = vsyncpa [#allocation5], 1
    %s2161 = scalar_lea.sflag [#allocation5], 1
    %2162 = vsyncpa %s2161, 1

</llo_original>
